<compile_context>
chip_gen: v5e
topology: v5e:2x2
jax: 0.10.0
libtpu: 0.0.40
codegen_flags: <defaults>
</compile_context>

<pallas_src>
import numpy as np
import jax
import jax.numpy as jnp
from jax import lax
from jax.experimental import pallas as pl
from jax.experimental.pallas import tpu as pltpu

NEURONS = 8        # numneurons
NUM_HIDDEN = 3     # numlayers -> 3 x (Linear(8,8) + Tanh)
NUM_IN = 1
NUM_OUT = 1
LANES = 128        # batch elements per lane row
STRIP = 16         # rows per register-resident strip (2 vregs per intermediate)
TILE_ROWS = 512    # max sublane rows per grid step (multiple of STRIP)


def _round_up(a, m):
    return -(-a // m) * m


def _tree_sum(terms):
    """Pairwise/tree reduction: shortens the VALU dependency chain."""
    terms = list(terms)
    while len(terms) > 1:
        nxt = [terms[i] + terms[i + 1] for i in range(0, len(terms) - 1, 2)]
        if len(terms) % 2:
            nxt.append(terms[-1])
        terms = nxt
    return terms[0]


def mlp_kernel(x_ref,
               w0, b0,        # Linear(1 -> 8):      w0 (8,),        b0 (8,)
               w1, b1,        # Linear(8 -> 8)+tanh: w (out,in)=(8,8), b (8,)
               w2, b2,
               w3, b3,
               w4, b4,        # Linear(8 -> 1):      w4 (8,),        b4 (1,)
               o_ref):
    n_strips = x_ref.shape[0] // STRIP

    def strip_body(s, carry):
        start = pl.multiple_of(s * STRIP, STRIP)
        x = x_ref[pl.ds(start, STRIP), :]            # (STRIP, 128) f32, lane-dense

        # Linear(1 -> 8): pure broadcast FMA on the VPU.
        h = [x * w0[j] + b0[j] for j in range(NEURONS)]

        # 3 x (Linear(8 -> 8) + Tanh): scalar-broadcast FMAs + tree add, tanh on EUP.
        for w, b in ((w1, b1), (w2, b2), (w3, b3)):
            nh = []
            for o in range(NEURONS):
                prods = [h[i] * w[o, i] for i in range(NEURONS)]
                acc = _tree_sum(prods)
                nh.append(jnp.tanh(acc + b[o]))
            h = nh

        # Linear(8 -> 1): 8-term tree reduction on the VPU.
        out = _tree_sum([h[i] * w4[i] for i in range(NEURONS)])
        o_ref[pl.ds(start, STRIP), :] = out + b4[0]
        return carry

    if n_strips == 1:
        strip_body(0, 0)
    else:
        lax.fori_loop(0, n_strips, strip_body, 0)


def init_params(key):
    """Deterministic PyTorch-default-style init: U(-1/sqrt(fan_in), +1/sqrt(fan_in)).

    Weights are stored as (in, out) (transposed vs. torch's (out, in))."""
    dims = [(NUM_IN, NEURONS)] + [(NEURONS, NEURONS)] * NUM_HIDDEN + [(NEURONS, NUM_OUT)]
    params = []
    for (fin, fout) in dims:
        key, kw, kb = jax.random.split(key, 3)
        bound = 1.0 / np.sqrt(fin)
        w = jax.random.uniform(kw, (fin, fout), jnp.float32, -bound, bound)
        b = jax.random.uniform(kb, (fout,), jnp.float32, -bound, bound)
        params.append((w, b))
    return params


def neuralnet_forward(x, params, tile_rows=TILE_ROWS):
    """Pallas implementation of NeuralNet.forward: returns (N, 1) f32, N = x.size."""
    xflat = x.reshape(-1).astype(jnp.float32)        # torch .view(-1, 1), lane-dense
    n = xflat.shape[0]

    rows = max(-(-n // LANES), 1)                    # ceil(n / 128)

    # Pick rows-per-step (tr): multiple of STRIP, aim for ~4 grid steps so the
    # "parallel" axis can shard across v7x's two TensorCores, but keep each
    # step >= 64 rows when the batch allows so per-step overhead stays hidden.
    tile_rows = max(STRIP, (tile_rows // STRIP) * STRIP)
    tr = _round_up(max(1, -(-rows // 4)), STRIP)                 # ~4 steps
    tr = max(tr, min(64, _round_up(rows, STRIP)))                # >= 64 rows/step if possible
    tr = min(tr, tile_rows)

    rows_pad = _round_up(rows, tr)
    n_pad = rows_pad * LANES

    if n_pad != n:
        x2d = jnp.pad(xflat, (0, n_pad - n)).reshape(rows_pad, LANES)
    else:
        x2d = xflat.reshape(rows_pad, LANES)         # no extra pad copy when aligned

    (w0, b0), (w1, b1), (w2, b2), (w3, b3), (w4, b4) = params
    flat = [
        w0[0, :], b0,          # (8,), (8,)
        w1.T, b1,              # (out, in) = (8, 8), (8,)
        w2.T, b2,
        w3.T, b3,
        w4[:, 0], b4,          # (8,), (1,)
    ]

    smem = pl.BlockSpec(memory_space=pltpu.MemorySpace.SMEM)   # whole tiny array in SMEM
    io_spec = pl.BlockSpec((tr, LANES), lambda i: (i, 0))

    out = pl.pallas_call(
        mlp_kernel,
        out_shape=jax.ShapeDtypeStruct((rows_pad, LANES), jnp.float32),
        grid_spec=pltpu.PrefetchScalarGridSpec(
            num_scalar_prefetch=0,
            grid=(rows_pad // tr,),
            in_specs=[io_spec] + [smem] * 10,
            out_specs=io_spec,
        ),
        compiler_params=pltpu.CompilerParams(
            dimension_semantics=("parallel",)),
    )(x2d, *flat)

    return out.reshape(-1)[:n].reshape(-1, 1)


def reference_forward(x, params):
    """Pure-JAX reference matching the PyTorch nn.Sequential forward (f32-exact matmuls)."""
    hp = jax.lax.Precision.HIGHEST
    h = x.reshape(-1, 1).astype(jnp.float32)
    h = jnp.dot(h, params[0][0], precision=hp) + params[0][1]      # Linear(1, 8)
    for i in range(1, 1 + NUM_HIDDEN):                             # 3 x (Linear + Tanh)
        h = jnp.tanh(jnp.dot(h, params[i][0], precision=hp) + params[i][1])
    h = jnp.dot(h, params[-1][0], precision=hp) + params[-1][1]    # Linear(8, 1)
    return h


if __name__ == "__main__":
    key = jax.random.PRNGKey(0)
    kp, kx, kx2 = jax.random.split(key, 3)

    params = init_params(kp)

    # Small input; torch forward flattens it with .view(-1, 1) -> (16, 1).
    # Exercises the padded-tail path (16 -> 2048 elements, single grid step).
    x = jax.random.normal(kx, (2, 8), jnp.float32)
    y = jax.block_until_ready(neuralnet_forward(x, params))
    y_ref = reference_forward(x, params)
    assert y.shape == (16, 1), y.shape
    assert np.allclose(np.asarray(y), np.asarray(y_ref), rtol=1e-5, atol=1e-5), (
        "Pallas output does not match reference (small case)")

    # Secondary check: exact (rows, 128) fill (no wrapper pad), multi-step grid
    # (2 steps of 32 rows) with multiple register-resident strips per step.
    x2 = jax.random.normal(kx2, (64, 128), jnp.float32)
    y2 = jax.block_until_ready(neuralnet_forward(x2, params, tile_rows=32))
    y2_ref = reference_forward(x2, params)
    assert y2.shape == (64 * 128, 1), y2.shape
    assert np.allclose(np.asarray(y2), np.asarray(y2_ref), rtol=1e-5, atol=1e-5), (
        "Pallas output does not match reference (multi-tile case)")

    print("KERNEL_OK")
</pallas_src>

<mosaic_0001>
module attributes {stable_mosaic.version = 11 : i64} {
  func.func @mlp_kernel(%arg0: i32, %arg1: memref<16x128xf32, #tpu.memory_space<vmem>>, %arg2: memref<8xf32, #tpu.memory_space<smem>>, %arg3: memref<8xf32, #tpu.memory_space<smem>>, %arg4: memref<8x8xf32, #tpu.memory_space<smem>>, %arg5: memref<8xf32, #tpu.memory_space<smem>>, %arg6: memref<8x8xf32, #tpu.memory_space<smem>>, %arg7: memref<8xf32, #tpu.memory_space<smem>>, %arg8: memref<8x8xf32, #tpu.memory_space<smem>>, %arg9: memref<8xf32, #tpu.memory_space<smem>>, %arg10: memref<8xf32, #tpu.memory_space<smem>>, %arg11: memref<1xf32, #tpu.memory_space<smem>>, %arg12: memref<16x128xf32, #tpu.memory_space<vmem>>) attributes {dimension_semantics = [#tpu.dimension_semantics<parallel>], iteration_bounds = array<i64: 1>, scalar_prefetch = 0 : i64, scratch_operands = 0 : i64, tpu.core_type = #tpu.core_type<tc>, window_params = [{transform_indices = @transform_0, window_bounds = array<i64: 16, 128>}, {transform_indices = @transform_1, window_bounds = array<i64: 8>}, {transform_indices = @transform_2, window_bounds = array<i64: 8>}, {transform_indices = @transform_3, window_bounds = array<i64: 8, 8>}, {transform_indices = @transform_4, window_bounds = array<i64: 8>}, {transform_indices = @transform_5, window_bounds = array<i64: 8, 8>}, {transform_indices = @transform_6, window_bounds = array<i64: 8>}, {transform_indices = @transform_7, window_bounds = array<i64: 8, 8>}, {transform_indices = @transform_8, window_bounds = array<i64: 8>}, {transform_indices = @transform_9, window_bounds = array<i64: 8>}, {transform_indices = @transform_10, window_bounds = array<i64: 1>}, {transform_indices = @transform_11, window_bounds = array<i64: 16, 128>}]} {
    %c0_i32 = arith.constant 0 : i32
    %0 = tpu.assume_multiple %c0_i32, 16 : i32
    %1 = arith.index_cast %0 : i32 to index
    %c0 = arith.constant 0 : index
    %2 = vector.load %arg1[%1, %c0] : memref<16x128xf32, #tpu.memory_space<vmem>>, vector<16x128xf32>
    %c0_0 = arith.constant 0 : index
    %3 = memref.load %arg2[%c0_0] : memref<8xf32, #tpu.memory_space<smem>>
    %4 = vector.broadcast %3 : f32 to vector<16x128xf32>
    %5 = arith.mulf %2, %4 : vector<16x128xf32>
    %c0_1 = arith.constant 0 : index
    %6 = memref.load %arg3[%c0_1] : memref<8xf32, #tpu.memory_space<smem>>
    %7 = vector.broadcast %6 : f32 to vector<16x128xf32>
    %8 = arith.addf %5, %7 : vector<16x128xf32>
    %c1 = arith.constant 1 : index
    %9 = memref.load %arg2[%c1] : memref<8xf32, #tpu.memory_space<smem>>
    %10 = vector.broadcast %9 : f32 to vector<16x128xf32>
    %11 = arith.mulf %2, %10 : vector<16x128xf32>
    %c1_2 = arith.constant 1 : index
    %12 = memref.load %arg3[%c1_2] : memref<8xf32, #tpu.memory_space<smem>>
    %13 = vector.broadcast %12 : f32 to vector<16x128xf32>
    %14 = arith.addf %11, %13 : vector<16x128xf32>
    %c2 = arith.constant 2 : index
    %15 = memref.load %arg2[%c2] : memref<8xf32, #tpu.memory_space<smem>>
    %16 = vector.broadcast %15 : f32 to vector<16x128xf32>
    %17 = arith.mulf %2, %16 : vector<16x128xf32>
    %c2_3 = arith.constant 2 : index
    %18 = memref.load %arg3[%c2_3] : memref<8xf32, #tpu.memory_space<smem>>
    %19 = vector.broadcast %18 : f32 to vector<16x128xf32>
    %20 = arith.addf %17, %19 : vector<16x128xf32>
    %c3 = arith.constant 3 : index
    %21 = memref.load %arg2[%c3] : memref<8xf32, #tpu.memory_space<smem>>
    %22 = vector.broadcast %21 : f32 to vector<16x128xf32>
    %23 = arith.mulf %2, %22 : vector<16x128xf32>
    %c3_4 = arith.constant 3 : index
    %24 = memref.load %arg3[%c3_4] : memref<8xf32, #tpu.memory_space<smem>>
    %25 = vector.broadcast %24 : f32 to vector<16x128xf32>
    %26 = arith.addf %23, %25 : vector<16x128xf32>
    %c4 = arith.constant 4 : index
    %27 = memref.load %arg2[%c4] : memref<8xf32, #tpu.memory_space<smem>>
    %28 = vector.broadcast %27 : f32 to vector<16x128xf32>
    %29 = arith.mulf %2, %28 : vector<16x128xf32>
    %c4_5 = arith.constant 4 : index
    %30 = memref.load %arg3[%c4_5] : memref<8xf32, #tpu.memory_space<smem>>
    %31 = vector.broadcast %30 : f32 to vector<16x128xf32>
    %32 = arith.addf %29, %31 : vector<16x128xf32>
    %c5 = arith.constant 5 : index
    %33 = memref.load %arg2[%c5] : memref<8xf32, #tpu.memory_space<smem>>
    %34 = vector.broadcast %33 : f32 to vector<16x128xf32>
    %35 = arith.mulf %2, %34 : vector<16x128xf32>
    %c5_6 = arith.constant 5 : index
    %36 = memref.load %arg3[%c5_6] : memref<8xf32, #tpu.memory_space<smem>>
    %37 = vector.broadcast %36 : f32 to vector<16x128xf32>
    %38 = arith.addf %35, %37 : vector<16x128xf32>
    %c6 = arith.constant 6 : index
    %39 = memref.load %arg2[%c6] : memref<8xf32, #tpu.memory_space<smem>>
    %40 = vector.broadcast %39 : f32 to vector<16x128xf32>
    %41 = arith.mulf %2, %40 : vector<16x128xf32>
    %c6_7 = arith.constant 6 : index
    %42 = memref.load %arg3[%c6_7] : memref<8xf32, #tpu.memory_space<smem>>
    %43 = vector.broadcast %42 : f32 to vector<16x128xf32>
    %44 = arith.addf %41, %43 : vector<16x128xf32>
    %c7 = arith.constant 7 : index
    %45 = memref.load %arg2[%c7] : memref<8xf32, #tpu.memory_space<smem>>
    %46 = vector.broadcast %45 : f32 to vector<16x128xf32>
    %47 = arith.mulf %2, %46 : vector<16x128xf32>
    %c7_8 = arith.constant 7 : index
    %48 = memref.load %arg3[%c7_8] : memref<8xf32, #tpu.memory_space<smem>>
    %49 = vector.broadcast %48 : f32 to vector<16x128xf32>
    %50 = arith.addf %47, %49 : vector<16x128xf32>
    %c0_9 = arith.constant 0 : index
    %c0_10 = arith.constant 0 : index
    %51 = memref.load %arg4[%c0_9, %c0_10] : memref<8x8xf32, #tpu.memory_space<smem>>
    %52 = vector.broadcast %51 : f32 to vector<16x128xf32>
    %53 = arith.mulf %8, %52 : vector<16x128xf32>
    %c0_11 = arith.constant 0 : index
    %c1_12 = arith.constant 1 : index
    %54 = memref.load %arg4[%c0_11, %c1_12] : memref<8x8xf32, #tpu.memory_space<smem>>
    %55 = vector.broadcast %54 : f32 to vector<16x128xf32>
    %56 = arith.mulf %14, %55 : vector<16x128xf32>
    %c0_13 = arith.constant 0 : index
    %c2_14 = arith.constant 2 : index
    %57 = memref.load %arg4[%c0_13, %c2_14] : memref<8x8xf32, #tpu.memory_space<smem>>
    %58 = vector.broadcast %57 : f32 to vector<16x128xf32>
    %59 = arith.mulf %20, %58 : vector<16x128xf32>
    %c0_15 = arith.constant 0 : index
    %c3_16 = arith.constant 3 : index
    %60 = memref.load %arg4[%c0_15, %c3_16] : memref<8x8xf32, #tpu.memory_space<smem>>
    %61 = vector.broadcast %60 : f32 to vector<16x128xf32>
    %62 = arith.mulf %26, %61 : vector<16x128xf32>
    %c0_17 = arith.constant 0 : index
    %c4_18 = arith.constant 4 : index
    %63 = memref.load %arg4[%c0_17, %c4_18] : memref<8x8xf32, #tpu.memory_space<smem>>
    %64 = vector.broadcast %63 : f32 to vector<16x128xf32>
    %65 = arith.mulf %32, %64 : vector<16x128xf32>
    %c0_19 = arith.constant 0 : index
    %c5_20 = arith.constant 5 : index
    %66 = memref.load %arg4[%c0_19, %c5_20] : memref<8x8xf32, #tpu.memory_space<smem>>
    %67 = vector.broadcast %66 : f32 to vector<16x128xf32>
    %68 = arith.mulf %38, %67 : vector<16x128xf32>
    %c0_21 = arith.constant 0 : index
    %c6_22 = arith.constant 6 : index
    %69 = memref.load %arg4[%c0_21, %c6_22] : memref<8x8xf32, #tpu.memory_space<smem>>
    %70 = vector.broadcast %69 : f32 to vector<16x128xf32>
    %71 = arith.mulf %44, %70 : vector<16x128xf32>
    %c0_23 = arith.constant 0 : index
    %c7_24 = arith.constant 7 : index
    %72 = memref.load %arg4[%c0_23, %c7_24] : memref<8x8xf32, #tpu.memory_space<smem>>
    %73 = vector.broadcast %72 : f32 to vector<16x128xf32>
    %74 = arith.mulf %50, %73 : vector<16x128xf32>
    %75 = arith.addf %53, %56 : vector<16x128xf32>
    %76 = arith.addf %59, %62 : vector<16x128xf32>
    %77 = arith.addf %65, %68 : vector<16x128xf32>
    %78 = arith.addf %71, %74 : vector<16x128xf32>
    %79 = arith.addf %75, %76 : vector<16x128xf32>
    %80 = arith.addf %77, %78 : vector<16x128xf32>
    %81 = arith.addf %79, %80 : vector<16x128xf32>
    %c0_25 = arith.constant 0 : index
    %82 = memref.load %arg5[%c0_25] : memref<8xf32, #tpu.memory_space<smem>>
    %83 = vector.broadcast %82 : f32 to vector<16x128xf32>
    %84 = arith.addf %81, %83 : vector<16x128xf32>
    %85 = math.tanh %84 : vector<16x128xf32>
    %c1_26 = arith.constant 1 : index
    %c0_27 = arith.constant 0 : index
    %86 = memref.load %arg4[%c1_26, %c0_27] : memref<8x8xf32, #tpu.memory_space<smem>>
    %87 = vector.broadcast %86 : f32 to vector<16x128xf32>
    %88 = arith.mulf %8, %87 : vector<16x128xf32>
    %c1_28 = arith.constant 1 : index
    %c1_29 = arith.constant 1 : index
    %89 = memref.load %arg4[%c1_28, %c1_29] : memref<8x8xf32, #tpu.memory_space<smem>>
    %90 = vector.broadcast %89 : f32 to vector<16x128xf32>
    %91 = arith.mulf %14, %90 : vector<16x128xf32>
    %c1_30 = arith.constant 1 : index
    %c2_31 = arith.constant 2 : index
    %92 = memref.load %arg4[%c1_30, %c2_31] : memref<8x8xf32, #tpu.memory_space<smem>>
    %93 = vector.broadcast %92 : f32 to vector<16x128xf32>
    %94 = arith.mulf %20, %93 : vector<16x128xf32>
    %c1_32 = arith.constant 1 : index
    %c3_33 = arith.constant 3 : index
    %95 = memref.load %arg4[%c1_32, %c3_33] : memref<8x8xf32, #tpu.memory_space<smem>>
    %96 = vector.broadcast %95 : f32 to vector<16x128xf32>
    %97 = arith.mulf %26, %96 : vector<16x128xf32>
    %c1_34 = arith.constant 1 : index
    %c4_35 = arith.constant 4 : index
    %98 = memref.load %arg4[%c1_34, %c4_35] : memref<8x8xf32, #tpu.memory_space<smem>>
    %99 = vector.broadcast %98 : f32 to vector<16x128xf32>
    %100 = arith.mulf %32, %99 : vector<16x128xf32>
    %c1_36 = arith.constant 1 : index
    %c5_37 = arith.constant 5 : index
    %101 = memref.load %arg4[%c1_36, %c5_37] : memref<8x8xf32, #tpu.memory_space<smem>>
    %102 = vector.broadcast %101 : f32 to vector<16x128xf32>
    %103 = arith.mulf %38, %102 : vector<16x128xf32>
    %c1_38 = arith.constant 1 : index
    %c6_39 = arith.constant 6 : index
    %104 = memref.load %arg4[%c1_38, %c6_39] : memref<8x8xf32, #tpu.memory_space<smem>>
    %105 = vector.broadcast %104 : f32 to vector<16x128xf32>
    %106 = arith.mulf %44, %105 : vector<16x128xf32>
    %c1_40 = arith.constant 1 : index
    %c7_41 = arith.constant 7 : index
    %107 = memref.load %arg4[%c1_40, %c7_41] : memref<8x8xf32, #tpu.memory_space<smem>>
    %108 = vector.broadcast %107 : f32 to vector<16x128xf32>
    %109 = arith.mulf %50, %108 : vector<16x128xf32>
    %110 = arith.addf %88, %91 : vector<16x128xf32>
    %111 = arith.addf %94, %97 : vector<16x128xf32>
    %112 = arith.addf %100, %103 : vector<16x128xf32>
    %113 = arith.addf %106, %109 : vector<16x128xf32>
    %114 = arith.addf %110, %111 : vector<16x128xf32>
    %115 = arith.addf %112, %113 : vector<16x128xf32>
    %116 = arith.addf %114, %115 : vector<16x128xf32>
    %c1_42 = arith.constant 1 : index
    %117 = memref.load %arg5[%c1_42] : memref<8xf32, #tpu.memory_space<smem>>
    %118 = vector.broadcast %117 : f32 to vector<16x128xf32>
    %119 = arith.addf %116, %118 : vector<16x128xf32>
    %120 = math.tanh %119 : vector<16x128xf32>
    %c2_43 = arith.constant 2 : index
    %c0_44 = arith.constant 0 : index
    %121 = memref.load %arg4[%c2_43, %c0_44] : memref<8x8xf32, #tpu.memory_space<smem>>
    %122 = vector.broadcast %121 : f32 to vector<16x128xf32>
    %123 = arith.mulf %8, %122 : vector<16x128xf32>
    %c2_45 = arith.constant 2 : index
    %c1_46 = arith.constant 1 : index
    %124 = memref.load %arg4[%c2_45, %c1_46] : memref<8x8xf32, #tpu.memory_space<smem>>
    %125 = vector.broadcast %124 : f32 to vector<16x128xf32>
    %126 = arith.mulf %14, %125 : vector<16x128xf32>
    %c2_47 = arith.constant 2 : index
    %c2_48 = arith.constant 2 : index
    %127 = memref.load %arg4[%c2_47, %c2_48] : memref<8x8xf32, #tpu.memory_space<smem>>
    %128 = vector.broadcast %127 : f32 to vector<16x128xf32>
    %129 = arith.mulf %20, %128 : vector<16x128xf32>
    %c2_49 = arith.constant 2 : index
    %c3_50 = arith.constant 3 : index
    %130 = memref.load %arg4[%c2_49, %c3_50] : memref<8x8xf32, #tpu.memory_space<smem>>
    %131 = vector.broadcast %130 : f32 to vector<16x128xf32>
    %132 = arith.mulf %26, %131 : vector<16x128xf32>
    %c2_51 = arith.constant 2 : index
    %c4_52 = arith.constant 4 : index
    %133 = memref.load %arg4[%c2_51, %c4_52] : memref<8x8xf32, #tpu.memory_space<smem>>
    %134 = vector.broadcast %133 : f32 to vector<16x128xf32>
    %135 = arith.mulf %32, %134 : vector<16x128xf32>
    %c2_53 = arith.constant 2 : index
    %c5_54 = arith.constant 5 : index
    %136 = memref.load %arg4[%c2_53, %c5_54] : memref<8x8xf32, #tpu.memory_space<smem>>
    %137 = vector.broadcast %136 : f32 to vector<16x128xf32>
    %138 = arith.mulf %38, %137 : vector<16x128xf32>
    %c2_55 = arith.constant 2 : index
    %c6_56 = arith.constant 6 : index
    %139 = memref.load %arg4[%c2_55, %c6_56] : memref<8x8xf32, #tpu.memory_space<smem>>
    %140 = vector.broadcast %139 : f32 to vector<16x128xf32>
    %141 = arith.mulf %44, %140 : vector<16x128xf32>
    %c2_57 = arith.constant 2 : index
    %c7_58 = arith.constant 7 : index
    %142 = memref.load %arg4[%c2_57, %c7_58] : memref<8x8xf32, #tpu.memory_space<smem>>
    %143 = vector.broadcast %142 : f32 to vector<16x128xf32>
    %144 = arith.mulf %50, %143 : vector<16x128xf32>
    %145 = arith.addf %123, %126 : vector<16x128xf32>
    %146 = arith.addf %129, %132 : vector<16x128xf32>
    %147 = arith.addf %135, %138 : vector<16x128xf32>
    %148 = arith.addf %141, %144 : vector<16x128xf32>
    %149 = arith.addf %145, %146 : vector<16x128xf32>
    %150 = arith.addf %147, %148 : vector<16x128xf32>
    %151 = arith.addf %149, %150 : vector<16x128xf32>
    %c2_59 = arith.constant 2 : index
    %152 = memref.load %arg5[%c2_59] : memref<8xf32, #tpu.memory_space<smem>>
    %153 = vector.broadcast %152 : f32 to vector<16x128xf32>
    %154 = arith.addf %151, %153 : vector<16x128xf32>
    %155 = math.tanh %154 : vector<16x128xf32>
    %c3_60 = arith.constant 3 : index
    %c0_61 = arith.constant 0 : index
    %156 = memref.load %arg4[%c3_60, %c0_61] : memref<8x8xf32, #tpu.memory_space<smem>>
    %157 = vector.broadcast %156 : f32 to vector<16x128xf32>
    %158 = arith.mulf %8, %157 : vector<16x128xf32>
    %c3_62 = arith.constant 3 : index
    %c1_63 = arith.constant 1 : index
    %159 = memref.load %arg4[%c3_62, %c1_63] : memref<8x8xf32, #tpu.memory_space<smem>>
    %160 = vector.broadcast %159 : f32 to vector<16x128xf32>
    %161 = arith.mulf %14, %160 : vector<16x128xf32>
    %c3_64 = arith.constant 3 : index
    %c2_65 = arith.constant 2 : index
    %162 = memref.load %arg4[%c3_64, %c2_65] : memref<8x8xf32, #tpu.memory_space<smem>>
    %163 = vector.broadcast %162 : f32 to vector<16x128xf32>
    %164 = arith.mulf %20, %163 : vector<16x128xf32>
    %c3_66 = arith.constant 3 : index
    %c3_67 = arith.constant 3 : index
    %165 = memref.load %arg4[%c3_66, %c3_67] : memref<8x8xf32, #tpu.memory_space<smem>>
    %166 = vector.broadcast %165 : f32 to vector<16x128xf32>
    %167 = arith.mulf %26, %166 : vector<16x128xf32>
    %c3_68 = arith.constant 3 : index
    %c4_69 = arith.constant 4 : index
    %168 = memref.load %arg4[%c3_68, %c4_69] : memref<8x8xf32, #tpu.memory_space<smem>>
    %169 = vector.broadcast %168 : f32 to vector<16x128xf32>
    %170 = arith.mulf %32, %169 : vector<16x128xf32>
    %c3_70 = arith.constant 3 : index
    %c5_71 = arith.constant 5 : index
    %171 = memref.load %arg4[%c3_70, %c5_71] : memref<8x8xf32, #tpu.memory_space<smem>>
    %172 = vector.broadcast %171 : f32 to vector<16x128xf32>
    %173 = arith.mulf %38, %172 : vector<16x128xf32>
    %c3_72 = arith.constant 3 : index
    %c6_73 = arith.constant 6 : index
    %174 = memref.load %arg4[%c3_72, %c6_73] : memref<8x8xf32, #tpu.memory_space<smem>>
    %175 = vector.broadcast %174 : f32 to vector<16x128xf32>
    %176 = arith.mulf %44, %175 : vector<16x128xf32>
    %c3_74 = arith.constant 3 : index
    %c7_75 = arith.constant 7 : index
    %177 = memref.load %arg4[%c3_74, %c7_75] : memref<8x8xf32, #tpu.memory_space<smem>>
    %178 = vector.broadcast %177 : f32 to vector<16x128xf32>
    %179 = arith.mulf %50, %178 : vector<16x128xf32>
    %180 = arith.addf %158, %161 : vector<16x128xf32>
    %181 = arith.addf %164, %167 : vector<16x128xf32>
    %182 = arith.addf %170, %173 : vector<16x128xf32>
    %183 = arith.addf %176, %179 : vector<16x128xf32>
    %184 = arith.addf %180, %181 : vector<16x128xf32>
    %185 = arith.addf %182, %183 : vector<16x128xf32>
    %186 = arith.addf %184, %185 : vector<16x128xf32>
    %c3_76 = arith.constant 3 : index
    %187 = memref.load %arg5[%c3_76] : memref<8xf32, #tpu.memory_space<smem>>
    %188 = vector.broadcast %187 : f32 to vector<16x128xf32>
    %189 = arith.addf %186, %188 : vector<16x128xf32>
    %190 = math.tanh %189 : vector<16x128xf32>
    %c4_77 = arith.constant 4 : index
    %c0_78 = arith.constant 0 : index
    %191 = memref.load %arg4[%c4_77, %c0_78] : memref<8x8xf32, #tpu.memory_space<smem>>
    %192 = vector.broadcast %191 : f32 to vector<16x128xf32>
    %193 = arith.mulf %8, %192 : vector<16x128xf32>
    %c4_79 = arith.constant 4 : index
    %c1_80 = arith.constant 1 : index
    %194 = memref.load %arg4[%c4_79, %c1_80] : memref<8x8xf32, #tpu.memory_space<smem>>
    %195 = vector.broadcast %194 : f32 to vector<16x128xf32>
    %196 = arith.mulf %14, %195 : vector<16x128xf32>
    %c4_81 = arith.constant 4 : index
    %c2_82 = arith.constant 2 : index
    %197 = memref.load %arg4[%c4_81, %c2_82] : memref<8x8xf32, #tpu.memory_space<smem>>
    %198 = vector.broadcast %197 : f32 to vector<16x128xf32>
    %199 = arith.mulf %20, %198 : vector<16x128xf32>
    %c4_83 = arith.constant 4 : index
    %c3_84 = arith.constant 3 : index
    %200 = memref.load %arg4[%c4_83, %c3_84] : memref<8x8xf32, #tpu.memory_space<smem>>
    %201 = vector.broadcast %200 : f32 to vector<16x128xf32>
    %202 = arith.mulf %26, %201 : vector<16x128xf32>
    %c4_85 = arith.constant 4 : index
    %c4_86 = arith.constant 4 : index
    %203 = memref.load %arg4[%c4_85, %c4_86] : memref<8x8xf32, #tpu.memory_space<smem>>
    %204 = vector.broadcast %203 : f32 to vector<16x128xf32>
    %205 = arith.mulf %32, %204 : vector<16x128xf32>
    %c4_87 = arith.constant 4 : index
    %c5_88 = arith.constant 5 : index
    %206 = memref.load %arg4[%c4_87, %c5_88] : memref<8x8xf32, #tpu.memory_space<smem>>
    %207 = vector.broadcast %206 : f32 to vector<16x128xf32>
    %208 = arith.mulf %38, %207 : vector<16x128xf32>
    %c4_89 = arith.constant 4 : index
    %c6_90 = arith.constant 6 : index
    %209 = memref.load %arg4[%c4_89, %c6_90] : memref<8x8xf32, #tpu.memory_space<smem>>
    %210 = vector.broadcast %209 : f32 to vector<16x128xf32>
    %211 = arith.mulf %44, %210 : vector<16x128xf32>
    %c4_91 = arith.constant 4 : index
    %c7_92 = arith.constant 7 : index
    %212 = memref.load %arg4[%c4_91, %c7_92] : memref<8x8xf32, #tpu.memory_space<smem>>
    %213 = vector.broadcast %212 : f32 to vector<16x128xf32>
    %214 = arith.mulf %50, %213 : vector<16x128xf32>
    %215 = arith.addf %193, %196 : vector<16x128xf32>
    %216 = arith.addf %199, %202 : vector<16x128xf32>
    %217 = arith.addf %205, %208 : vector<16x128xf32>
    %218 = arith.addf %211, %214 : vector<16x128xf32>
    %219 = arith.addf %215, %216 : vector<16x128xf32>
    %220 = arith.addf %217, %218 : vector<16x128xf32>
    %221 = arith.addf %219, %220 : vector<16x128xf32>
    %c4_93 = arith.constant 4 : index
    %222 = memref.load %arg5[%c4_93] : memref<8xf32, #tpu.memory_space<smem>>
    %223 = vector.broadcast %222 : f32 to vector<16x128xf32>
    %224 = arith.addf %221, %223 : vector<16x128xf32>
    %225 = math.tanh %224 : vector<16x128xf32>
    %c5_94 = arith.constant 5 : index
    %c0_95 = arith.constant 0 : index
    %226 = memref.load %arg4[%c5_94, %c0_95] : memref<8x8xf32, #tpu.memory_space<smem>>
    %227 = vector.broadcast %226 : f32 to vector<16x128xf32>
    %228 = arith.mulf %8, %227 : vector<16x128xf32>
    %c5_96 = arith.constant 5 : index
    %c1_97 = arith.constant 1 : index
    %229 = memref.load %arg4[%c5_96, %c1_97] : memref<8x8xf32, #tpu.memory_space<smem>>
    %230 = vector.broadcast %229 : f32 to vector<16x128xf32>
    %231 = arith.mulf %14, %230 : vector<16x128xf32>
    %c5_98 = arith.constant 5 : index
    %c2_99 = arith.constant 2 : index
    %232 = memref.load %arg4[%c5_98, %c2_99] : memref<8x8xf32, #tpu.memory_space<smem>>
    %233 = vector.broadcast %232 : f32 to vector<16x128xf32>
    %234 = arith.mulf %20, %233 : vector<16x128xf32>
    %c5_100 = arith.constant 5 : index
    %c3_101 = arith.constant 3 : index
    %235 = memref.load %arg4[%c5_100, %c3_101] : memref<8x8xf32, #tpu.memory_space<smem>>
    %236 = vector.broadcast %235 : f32 to vector<16x128xf32>
    %237 = arith.mulf %26, %236 : vector<16x128xf32>
    %c5_102 = arith.constant 5 : index
    %c4_103 = arith.constant 4 : index
    %238 = memref.load %arg4[%c5_102, %c4_103] : memref<8x8xf32, #tpu.memory_space<smem>>
    %239 = vector.broadcast %238 : f32 to vector<16x128xf32>
    %240 = arith.mulf %32, %239 : vector<16x128xf32>
    %c5_104 = arith.constant 5 : index
    %c5_105 = arith.constant 5 : index
    %241 = memref.load %arg4[%c5_104, %c5_105] : memref<8x8xf32, #tpu.memory_space<smem>>
    %242 = vector.broadcast %241 : f32 to vector<16x128xf32>
    %243 = arith.mulf %38, %242 : vector<16x128xf32>
    %c5_106 = arith.constant 5 : index
    %c6_107 = arith.constant 6 : index
    %244 = memref.load %arg4[%c5_106, %c6_107] : memref<8x8xf32, #tpu.memory_space<smem>>
    %245 = vector.broadcast %244 : f32 to vector<16x128xf32>
    %246 = arith.mulf %44, %245 : vector<16x128xf32>
    %c5_108 = arith.constant 5 : index
    %c7_109 = arith.constant 7 : index
    %247 = memref.load %arg4[%c5_108, %c7_109] : memref<8x8xf32, #tpu.memory_space<smem>>
    %248 = vector.broadcast %247 : f32 to vector<16x128xf32>
    %249 = arith.mulf %50, %248 : vector<16x128xf32>
    %250 = arith.addf %228, %231 : vector<16x128xf32>
    %251 = arith.addf %234, %237 : vector<16x128xf32>
    %252 = arith.addf %240, %243 : vector<16x128xf32>
    %253 = arith.addf %246, %249 : vector<16x128xf32>
    %254 = arith.addf %250, %251 : vector<16x128xf32>
    %255 = arith.addf %252, %253 : vector<16x128xf32>
    %256 = arith.addf %254, %255 : vector<16x128xf32>
    %c5_110 = arith.constant 5 : index
    %257 = memref.load %arg5[%c5_110] : memref<8xf32, #tpu.memory_space<smem>>
    %258 = vector.broadcast %257 : f32 to vector<16x128xf32>
    %259 = arith.addf %256, %258 : vector<16x128xf32>
    %260 = math.tanh %259 : vector<16x128xf32>
    %c6_111 = arith.constant 6 : index
    %c0_112 = arith.constant 0 : index
    %261 = memref.load %arg4[%c6_111, %c0_112] : memref<8x8xf32, #tpu.memory_space<smem>>
    %262 = vector.broadcast %261 : f32 to vector<16x128xf32>
    %263 = arith.mulf %8, %262 : vector<16x128xf32>
    %c6_113 = arith.constant 6 : index
    %c1_114 = arith.constant 1 : index
    %264 = memref.load %arg4[%c6_113, %c1_114] : memref<8x8xf32, #tpu.memory_space<smem>>
    %265 = vector.broadcast %264 : f32 to vector<16x128xf32>
    %266 = arith.mulf %14, %265 : vector<16x128xf32>
    %c6_115 = arith.constant 6 : index
    %c2_116 = arith.constant 2 : index
    %267 = memref.load %arg4[%c6_115, %c2_116] : memref<8x8xf32, #tpu.memory_space<smem>>
    %268 = vector.broadcast %267 : f32 to vector<16x128xf32>
    %269 = arith.mulf %20, %268 : vector<16x128xf32>
    %c6_117 = arith.constant 6 : index
    %c3_118 = arith.constant 3 : index
    %270 = memref.load %arg4[%c6_117, %c3_118] : memref<8x8xf32, #tpu.memory_space<smem>>
    %271 = vector.broadcast %270 : f32 to vector<16x128xf32>
    %272 = arith.mulf %26, %271 : vector<16x128xf32>
    %c6_119 = arith.constant 6 : index
    %c4_120 = arith.constant 4 : index
    %273 = memref.load %arg4[%c6_119, %c4_120] : memref<8x8xf32, #tpu.memory_space<smem>>
    %274 = vector.broadcast %273 : f32 to vector<16x128xf32>
    %275 = arith.mulf %32, %274 : vector<16x128xf32>
    %c6_121 = arith.constant 6 : index
    %c5_122 = arith.constant 5 : index
    %276 = memref.load %arg4[%c6_121, %c5_122] : memref<8x8xf32, #tpu.memory_space<smem>>
    %277 = vector.broadcast %276 : f32 to vector<16x128xf32>
    %278 = arith.mulf %38, %277 : vector<16x128xf32>
    %c6_123 = arith.constant 6 : index
    %c6_124 = arith.constant 6 : index
    %279 = memref.load %arg4[%c6_123, %c6_124] : memref<8x8xf32, #tpu.memory_space<smem>>
    %280 = vector.broadcast %279 : f32 to vector<16x128xf32>
    %281 = arith.mulf %44, %280 : vector<16x128xf32>
    %c6_125 = arith.constant 6 : index
    %c7_126 = arith.constant 7 : index
    %282 = memref.load %arg4[%c6_125, %c7_126] : memref<8x8xf32, #tpu.memory_space<smem>>
    %283 = vector.broadcast %282 : f32 to vector<16x128xf32>
    %284 = arith.mulf %50, %283 : vector<16x128xf32>
    %285 = arith.addf %263, %266 : vector<16x128xf32>
    %286 = arith.addf %269, %272 : vector<16x128xf32>
    %287 = arith.addf %275, %278 : vector<16x128xf32>
    %288 = arith.addf %281, %284 : vector<16x128xf32>
    %289 = arith.addf %285, %286 : vector<16x128xf32>
    %290 = arith.addf %287, %288 : vector<16x128xf32>
    %291 = arith.addf %289, %290 : vector<16x128xf32>
    %c6_127 = arith.constant 6 : index
    %292 = memref.load %arg5[%c6_127] : memref<8xf32, #tpu.memory_space<smem>>
    %293 = vector.broadcast %292 : f32 to vector<16x128xf32>
    %294 = arith.addf %291, %293 : vector<16x128xf32>
    %295 = math.tanh %294 : vector<16x128xf32>
    %c7_128 = arith.constant 7 : index
    %c0_129 = arith.constant 0 : index
    %296 = memref.load %arg4[%c7_128, %c0_129] : memref<8x8xf32, #tpu.memory_space<smem>>
    %297 = vector.broadcast %296 : f32 to vector<16x128xf32>
    %298 = arith.mulf %8, %297 : vector<16x128xf32>
    %c7_130 = arith.constant 7 : index
    %c1_131 = arith.constant 1 : index
    %299 = memref.load %arg4[%c7_130, %c1_131] : memref<8x8xf32, #tpu.memory_space<smem>>
    %300 = vector.broadcast %299 : f32 to vector<16x128xf32>
    %301 = arith.mulf %14, %300 : vector<16x128xf32>
    %c7_132 = arith.constant 7 : index
    %c2_133 = arith.constant 2 : index
    %302 = memref.load %arg4[%c7_132, %c2_133] : memref<8x8xf32, #tpu.memory_space<smem>>
    %303 = vector.broadcast %302 : f32 to vector<16x128xf32>
    %304 = arith.mulf %20, %303 : vector<16x128xf32>
    %c7_134 = arith.constant 7 : index
    %c3_135 = arith.constant 3 : index
    %305 = memref.load %arg4[%c7_134, %c3_135] : memref<8x8xf32, #tpu.memory_space<smem>>
    %306 = vector.broadcast %305 : f32 to vector<16x128xf32>
    %307 = arith.mulf %26, %306 : vector<16x128xf32>
    %c7_136 = arith.constant 7 : index
    %c4_137 = arith.constant 4 : index
    %308 = memref.load %arg4[%c7_136, %c4_137] : memref<8x8xf32, #tpu.memory_space<smem>>
    %309 = vector.broadcast %308 : f32 to vector<16x128xf32>
    %310 = arith.mulf %32, %309 : vector<16x128xf32>
    %c7_138 = arith.constant 7 : index
    %c5_139 = arith.constant 5 : index
    %311 = memref.load %arg4[%c7_138, %c5_139] : memref<8x8xf32, #tpu.memory_space<smem>>
    %312 = vector.broadcast %311 : f32 to vector<16x128xf32>
    %313 = arith.mulf %38, %312 : vector<16x128xf32>
    %c7_140 = arith.constant 7 : index
    %c6_141 = arith.constant 6 : index
    %314 = memref.load %arg4[%c7_140, %c6_141] : memref<8x8xf32, #tpu.memory_space<smem>>
    %315 = vector.broadcast %314 : f32 to vector<16x128xf32>
    %316 = arith.mulf %44, %315 : vector<16x128xf32>
    %c7_142 = arith.constant 7 : index
    %c7_143 = arith.constant 7 : index
    %317 = memref.load %arg4[%c7_142, %c7_143] : memref<8x8xf32, #tpu.memory_space<smem>>
    %318 = vector.broadcast %317 : f32 to vector<16x128xf32>
    %319 = arith.mulf %50, %318 : vector<16x128xf32>
    %320 = arith.addf %298, %301 : vector<16x128xf32>
    %321 = arith.addf %304, %307 : vector<16x128xf32>
    %322 = arith.addf %310, %313 : vector<16x128xf32>
    %323 = arith.addf %316, %319 : vector<16x128xf32>
    %324 = arith.addf %320, %321 : vector<16x128xf32>
    %325 = arith.addf %322, %323 : vector<16x128xf32>
    %326 = arith.addf %324, %325 : vector<16x128xf32>
    %c7_144 = arith.constant 7 : index
    %327 = memref.load %arg5[%c7_144] : memref<8xf32, #tpu.memory_space<smem>>
    %328 = vector.broadcast %327 : f32 to vector<16x128xf32>
    %329 = arith.addf %326, %328 : vector<16x128xf32>
    %330 = math.tanh %329 : vector<16x128xf32>
    %c0_145 = arith.constant 0 : index
    %c0_146 = arith.constant 0 : index
    %331 = memref.load %arg6[%c0_145, %c0_146] : memref<8x8xf32, #tpu.memory_space<smem>>
    %332 = vector.broadcast %331 : f32 to vector<16x128xf32>
    %333 = arith.mulf %85, %332 : vector<16x128xf32>
    %c0_147 = arith.constant 0 : index
    %c1_148 = arith.constant 1 : index
    %334 = memref.load %arg6[%c0_147, %c1_148] : memref<8x8xf32, #tpu.memory_space<smem>>
    %335 = vector.broadcast %334 : f32 to vector<16x128xf32>
    %336 = arith.mulf %120, %335 : vector<16x128xf32>
    %c0_149 = arith.constant 0 : index
    %c2_150 = arith.constant 2 : index
    %337 = memref.load %arg6[%c0_149, %c2_150] : memref<8x8xf32, #tpu.memory_space<smem>>
    %338 = vector.broadcast %337 : f32 to vector<16x128xf32>
    %339 = arith.mulf %155, %338 : vector<16x128xf32>
    %c0_151 = arith.constant 0 : index
    %c3_152 = arith.constant 3 : index
    %340 = memref.load %arg6[%c0_151, %c3_152] : memref<8x8xf32, #tpu.memory_space<smem>>
    %341 = vector.broadcast %340 : f32 to vector<16x128xf32>
    %342 = arith.mulf %190, %341 : vector<16x128xf32>
    %c0_153 = arith.constant 0 : index
    %c4_154 = arith.constant 4 : index
    %343 = memref.load %arg6[%c0_153, %c4_154] : memref<8x8xf32, #tpu.memory_space<smem>>
    %344 = vector.broadcast %343 : f32 to vector<16x128xf32>
    %345 = arith.mulf %225, %344 : vector<16x128xf32>
    %c0_155 = arith.constant 0 : index
    %c5_156 = arith.constant 5 : index
    %346 = memref.load %arg6[%c0_155, %c5_156] : memref<8x8xf32, #tpu.memory_space<smem>>
    %347 = vector.broadcast %346 : f32 to vector<16x128xf32>
    %348 = arith.mulf %260, %347 : vector<16x128xf32>
    %c0_157 = arith.constant 0 : index
    %c6_158 = arith.constant 6 : index
    %349 = memref.load %arg6[%c0_157, %c6_158] : memref<8x8xf32, #tpu.memory_space<smem>>
    %350 = vector.broadcast %349 : f32 to vector<16x128xf32>
    %351 = arith.mulf %295, %350 : vector<16x128xf32>
    %c0_159 = arith.constant 0 : index
    %c7_160 = arith.constant 7 : index
    %352 = memref.load %arg6[%c0_159, %c7_160] : memref<8x8xf32, #tpu.memory_space<smem>>
    %353 = vector.broadcast %352 : f32 to vector<16x128xf32>
    %354 = arith.mulf %330, %353 : vector<16x128xf32>
    %355 = arith.addf %333, %336 : vector<16x128xf32>
    %356 = arith.addf %339, %342 : vector<16x128xf32>
    %357 = arith.addf %345, %348 : vector<16x128xf32>
    %358 = arith.addf %351, %354 : vector<16x128xf32>
    %359 = arith.addf %355, %356 : vector<16x128xf32>
    %360 = arith.addf %357, %358 : vector<16x128xf32>
    %361 = arith.addf %359, %360 : vector<16x128xf32>
    %c0_161 = arith.constant 0 : index
    %362 = memref.load %arg7[%c0_161] : memref<8xf32, #tpu.memory_space<smem>>
    %363 = vector.broadcast %362 : f32 to vector<16x128xf32>
    %364 = arith.addf %361, %363 : vector<16x128xf32>
    %365 = math.tanh %364 : vector<16x128xf32>
    %c1_162 = arith.constant 1 : index
    %c0_163 = arith.constant 0 : index
    %366 = memref.load %arg6[%c1_162, %c0_163] : memref<8x8xf32, #tpu.memory_space<smem>>
    %367 = vector.broadcast %366 : f32 to vector<16x128xf32>
    %368 = arith.mulf %85, %367 : vector<16x128xf32>
    %c1_164 = arith.constant 1 : index
    %c1_165 = arith.constant 1 : index
    %369 = memref.load %arg6[%c1_164, %c1_165] : memref<8x8xf32, #tpu.memory_space<smem>>
    %370 = vector.broadcast %369 : f32 to vector<16x128xf32>
    %371 = arith.mulf %120, %370 : vector<16x128xf32>
    %c1_166 = arith.constant 1 : index
    %c2_167 = arith.constant 2 : index
    %372 = memref.load %arg6[%c1_166, %c2_167] : memref<8x8xf32, #tpu.memory_space<smem>>
    %373 = vector.broadcast %372 : f32 to vector<16x128xf32>
    %374 = arith.mulf %155, %373 : vector<16x128xf32>
    %c1_168 = arith.constant 1 : index
    %c3_169 = arith.constant 3 : index
    %375 = memref.load %arg6[%c1_168, %c3_169] : memref<8x8xf32, #tpu.memory_space<smem>>
    %376 = vector.broadcast %375 : f32 to vector<16x128xf32>
    %377 = arith.mulf %190, %376 : vector<16x128xf32>
    %c1_170 = arith.constant 1 : index
    %c4_171 = arith.constant 4 : index
    %378 = memref.load %arg6[%c1_170, %c4_171] : memref<8x8xf32, #tpu.memory_space<smem>>
    %379 = vector.broadcast %378 : f32 to vector<16x128xf32>
    %380 = arith.mulf %225, %379 : vector<16x128xf32>
    %c1_172 = arith.constant 1 : index
    %c5_173 = arith.constant 5 : index
    %381 = memref.load %arg6[%c1_172, %c5_173] : memref<8x8xf32, #tpu.memory_space<smem>>
    %382 = vector.broadcast %381 : f32 to vector<16x128xf32>
    %383 = arith.mulf %260, %382 : vector<16x128xf32>
    %c1_174 = arith.constant 1 : index
    %c6_175 = arith.constant 6 : index
    %384 = memref.load %arg6[%c1_174, %c6_175] : memref<8x8xf32, #tpu.memory_space<smem>>
    %385 = vector.broadcast %384 : f32 to vector<16x128xf32>
    %386 = arith.mulf %295, %385 : vector<16x128xf32>
    %c1_176 = arith.constant 1 : index
    %c7_177 = arith.constant 7 : index
    %387 = memref.load %arg6[%c1_176, %c7_177] : memref<8x8xf32, #tpu.memory_space<smem>>
    %388 = vector.broadcast %387 : f32 to vector<16x128xf32>
    %389 = arith.mulf %330, %388 : vector<16x128xf32>
    %390 = arith.addf %368, %371 : vector<16x128xf32>
    %391 = arith.addf %374, %377 : vector<16x128xf32>
    %392 = arith.addf %380, %383 : vector<16x128xf32>
    %393 = arith.addf %386, %389 : vector<16x128xf32>
    %394 = arith.addf %390, %391 : vector<16x128xf32>
    %395 = arith.addf %392, %393 : vector<16x128xf32>
    %396 = arith.addf %394, %395 : vector<16x128xf32>
    %c1_178 = arith.constant 1 : index
    %397 = memref.load %arg7[%c1_178] : memref<8xf32, #tpu.memory_space<smem>>
    %398 = vector.broadcast %397 : f32 to vector<16x128xf32>
    %399 = arith.addf %396, %398 : vector<16x128xf32>
    %400 = math.tanh %399 : vector<16x128xf32>
    %c2_179 = arith.constant 2 : index
    %c0_180 = arith.constant 0 : index
    %401 = memref.load %arg6[%c2_179, %c0_180] : memref<8x8xf32, #tpu.memory_space<smem>>
    %402 = vector.broadcast %401 : f32 to vector<16x128xf32>
    %403 = arith.mulf %85, %402 : vector<16x128xf32>
    %c2_181 = arith.constant 2 : index
    %c1_182 = arith.constant 1 : index
    %404 = memref.load %arg6[%c2_181, %c1_182] : memref<8x8xf32, #tpu.memory_space<smem>>
    %405 = vector.broadcast %404 : f32 to vector<16x128xf32>
    %406 = arith.mulf %120, %405 : vector<16x128xf32>
    %c2_183 = arith.constant 2 : index
    %c2_184 = arith.constant 2 : index
    %407 = memref.load %arg6[%c2_183, %c2_184] : memref<8x8xf32, #tpu.memory_space<smem>>
    %408 = vector.broadcast %407 : f32 to vector<16x128xf32>
    %409 = arith.mulf %155, %408 : vector<16x128xf32>
    %c2_185 = arith.constant 2 : index
    %c3_186 = arith.constant 3 : index
    %410 = memref.load %arg6[%c2_185, %c3_186] : memref<8x8xf32, #tpu.memory_space<smem>>
    %411 = vector.broadcast %410 : f32 to vector<16x128xf32>
    %412 = arith.mulf %190, %411 : vector<16x128xf32>
    %c2_187 = arith.constant 2 : index
    %c4_188 = arith.constant 4 : index
    %413 = memref.load %arg6[%c2_187, %c4_188] : memref<8x8xf32, #tpu.memory_space<smem>>
    %414 = vector.broadcast %413 : f32 to vector<16x128xf32>
    %415 = arith.mulf %225, %414 : vector<16x128xf32>
    %c2_189 = arith.constant 2 : index
    %c5_190 = arith.constant 5 : index
    %416 = memref.load %arg6[%c2_189, %c5_190] : memref<8x8xf32, #tpu.memory_space<smem>>
    %417 = vector.broadcast %416 : f32 to vector<16x128xf32>
    %418 = arith.mulf %260, %417 : vector<16x128xf32>
    %c2_191 = arith.constant 2 : index
    %c6_192 = arith.constant 6 : index
    %419 = memref.load %arg6[%c2_191, %c6_192] : memref<8x8xf32, #tpu.memory_space<smem>>
    %420 = vector.broadcast %419 : f32 to vector<16x128xf32>
    %421 = arith.mulf %295, %420 : vector<16x128xf32>
    %c2_193 = arith.constant 2 : index
    %c7_194 = arith.constant 7 : index
    %422 = memref.load %arg6[%c2_193, %c7_194] : memref<8x8xf32, #tpu.memory_space<smem>>
    %423 = vector.broadcast %422 : f32 to vector<16x128xf32>
    %424 = arith.mulf %330, %423 : vector<16x128xf32>
    %425 = arith.addf %403, %406 : vector<16x128xf32>
    %426 = arith.addf %409, %412 : vector<16x128xf32>
    %427 = arith.addf %415, %418 : vector<16x128xf32>
    %428 = arith.addf %421, %424 : vector<16x128xf32>
    %429 = arith.addf %425, %426 : vector<16x128xf32>
    %430 = arith.addf %427, %428 : vector<16x128xf32>
    %431 = arith.addf %429, %430 : vector<16x128xf32>
    %c2_195 = arith.constant 2 : index
    %432 = memref.load %arg7[%c2_195] : memref<8xf32, #tpu.memory_space<smem>>
    %433 = vector.broadcast %432 : f32 to vector<16x128xf32>
    %434 = arith.addf %431, %433 : vector<16x128xf32>
    %435 = math.tanh %434 : vector<16x128xf32>
    %c3_196 = arith.constant 3 : index
    %c0_197 = arith.constant 0 : index
    %436 = memref.load %arg6[%c3_196, %c0_197] : memref<8x8xf32, #tpu.memory_space<smem>>
    %437 = vector.broadcast %436 : f32 to vector<16x128xf32>
    %438 = arith.mulf %85, %437 : vector<16x128xf32>
    %c3_198 = arith.constant 3 : index
    %c1_199 = arith.constant 1 : index
    %439 = memref.load %arg6[%c3_198, %c1_199] : memref<8x8xf32, #tpu.memory_space<smem>>
    %440 = vector.broadcast %439 : f32 to vector<16x128xf32>
    %441 = arith.mulf %120, %440 : vector<16x128xf32>
    %c3_200 = arith.constant 3 : index
    %c2_201 = arith.constant 2 : index
    %442 = memref.load %arg6[%c3_200, %c2_201] : memref<8x8xf32, #tpu.memory_space<smem>>
    %443 = vector.broadcast %442 : f32 to vector<16x128xf32>
    %444 = arith.mulf %155, %443 : vector<16x128xf32>
    %c3_202 = arith.constant 3 : index
    %c3_203 = arith.constant 3 : index
    %445 = memref.load %arg6[%c3_202, %c3_203] : memref<8x8xf32, #tpu.memory_space<smem>>
    %446 = vector.broadcast %445 : f32 to vector<16x128xf32>
    %447 = arith.mulf %190, %446 : vector<16x128xf32>
    %c3_204 = arith.constant 3 : index
    %c4_205 = arith.constant 4 : index
    %448 = memref.load %arg6[%c3_204, %c4_205] : memref<8x8xf32, #tpu.memory_space<smem>>
    %449 = vector.broadcast %448 : f32 to vector<16x128xf32>
    %450 = arith.mulf %225, %449 : vector<16x128xf32>
    %c3_206 = arith.constant 3 : index
    %c5_207 = arith.constant 5 : index
    %451 = memref.load %arg6[%c3_206, %c5_207] : memref<8x8xf32, #tpu.memory_space<smem>>
    %452 = vector.broadcast %451 : f32 to vector<16x128xf32>
    %453 = arith.mulf %260, %452 : vector<16x128xf32>
    %c3_208 = arith.constant 3 : index
    %c6_209 = arith.constant 6 : index
    %454 = memref.load %arg6[%c3_208, %c6_209] : memref<8x8xf32, #tpu.memory_space<smem>>
    %455 = vector.broadcast %454 : f32 to vector<16x128xf32>
    %456 = arith.mulf %295, %455 : vector<16x128xf32>
    %c3_210 = arith.constant 3 : index
    %c7_211 = arith.constant 7 : index
    %457 = memref.load %arg6[%c3_210, %c7_211] : memref<8x8xf32, #tpu.memory_space<smem>>
    %458 = vector.broadcast %457 : f32 to vector<16x128xf32>
    %459 = arith.mulf %330, %458 : vector<16x128xf32>
    %460 = arith.addf %438, %441 : vector<16x128xf32>
    %461 = arith.addf %444, %447 : vector<16x128xf32>
    %462 = arith.addf %450, %453 : vector<16x128xf32>
    %463 = arith.addf %456, %459 : vector<16x128xf32>
    %464 = arith.addf %460, %461 : vector<16x128xf32>
    %465 = arith.addf %462, %463 : vector<16x128xf32>
    %466 = arith.addf %464, %465 : vector<16x128xf32>
    %c3_212 = arith.constant 3 : index
    %467 = memref.load %arg7[%c3_212] : memref<8xf32, #tpu.memory_space<smem>>
    %468 = vector.broadcast %467 : f32 to vector<16x128xf32>
    %469 = arith.addf %466, %468 : vector<16x128xf32>
    %470 = math.tanh %469 : vector<16x128xf32>
    %c4_213 = arith.constant 4 : index
    %c0_214 = arith.constant 0 : index
    %471 = memref.load %arg6[%c4_213, %c0_214] : memref<8x8xf32, #tpu.memory_space<smem>>
    %472 = vector.broadcast %471 : f32 to vector<16x128xf32>
    %473 = arith.mulf %85, %472 : vector<16x128xf32>
    %c4_215 = arith.constant 4 : index
    %c1_216 = arith.constant 1 : index
    %474 = memref.load %arg6[%c4_215, %c1_216] : memref<8x8xf32, #tpu.memory_space<smem>>
    %475 = vector.broadcast %474 : f32 to vector<16x128xf32>
    %476 = arith.mulf %120, %475 : vector<16x128xf32>
    %c4_217 = arith.constant 4 : index
    %c2_218 = arith.constant 2 : index
    %477 = memref.load %arg6[%c4_217, %c2_218] : memref<8x8xf32, #tpu.memory_space<smem>>
    %478 = vector.broadcast %477 : f32 to vector<16x128xf32>
    %479 = arith.mulf %155, %478 : vector<16x128xf32>
    %c4_219 = arith.constant 4 : index
    %c3_220 = arith.constant 3 : index
    %480 = memref.load %arg6[%c4_219, %c3_220] : memref<8x8xf32, #tpu.memory_space<smem>>
    %481 = vector.broadcast %480 : f32 to vector<16x128xf32>
    %482 = arith.mulf %190, %481 : vector<16x128xf32>
    %c4_221 = arith.constant 4 : index
    %c4_222 = arith.constant 4 : index
    %483 = memref.load %arg6[%c4_221, %c4_222] : memref<8x8xf32, #tpu.memory_space<smem>>
    %484 = vector.broadcast %483 : f32 to vector<16x128xf32>
    %485 = arith.mulf %225, %484 : vector<16x128xf32>
    %c4_223 = arith.constant 4 : index
    %c5_224 = arith.constant 5 : index
    %486 = memref.load %arg6[%c4_223, %c5_224] : memref<8x8xf32, #tpu.memory_space<smem>>
    %487 = vector.broadcast %486 : f32 to vector<16x128xf32>
    %488 = arith.mulf %260, %487 : vector<16x128xf32>
    %c4_225 = arith.constant 4 : index
    %c6_226 = arith.constant 6 : index
    %489 = memref.load %arg6[%c4_225, %c6_226] : memref<8x8xf32, #tpu.memory_space<smem>>
    %490 = vector.broadcast %489 : f32 to vector<16x128xf32>
    %491 = arith.mulf %295, %490 : vector<16x128xf32>
    %c4_227 = arith.constant 4 : index
    %c7_228 = arith.constant 7 : index
    %492 = memref.load %arg6[%c4_227, %c7_228] : memref<8x8xf32, #tpu.memory_space<smem>>
    %493 = vector.broadcast %492 : f32 to vector<16x128xf32>
    %494 = arith.mulf %330, %493 : vector<16x128xf32>
    %495 = arith.addf %473, %476 : vector<16x128xf32>
    %496 = arith.addf %479, %482 : vector<16x128xf32>
    %497 = arith.addf %485, %488 : vector<16x128xf32>
    %498 = arith.addf %491, %494 : vector<16x128xf32>
    %499 = arith.addf %495, %496 : vector<16x128xf32>
    %500 = arith.addf %497, %498 : vector<16x128xf32>
    %501 = arith.addf %499, %500 : vector<16x128xf32>
    %c4_229 = arith.constant 4 : index
    %502 = memref.load %arg7[%c4_229] : memref<8xf32, #tpu.memory_space<smem>>
    %503 = vector.broadcast %502 : f32 to vector<16x128xf32>
    %504 = arith.addf %501, %503 : vector<16x128xf32>
    %505 = math.tanh %504 : vector<16x128xf32>
    %c5_230 = arith.constant 5 : index
    %c0_231 = arith.constant 0 : index
    %506 = memref.load %arg6[%c5_230, %c0_231] : memref<8x8xf32, #tpu.memory_space<smem>>
    %507 = vector.broadcast %506 : f32 to vector<16x128xf32>
    %508 = arith.mulf %85, %507 : vector<16x128xf32>
    %c5_232 = arith.constant 5 : index
    %c1_233 = arith.constant 1 : index
    %509 = memref.load %arg6[%c5_232, %c1_233] : memref<8x8xf32, #tpu.memory_space<smem>>
    %510 = vector.broadcast %509 : f32 to vector<16x128xf32>
    %511 = arith.mulf %120, %510 : vector<16x128xf32>
    %c5_234 = arith.constant 5 : index
    %c2_235 = arith.constant 2 : index
    %512 = memref.load %arg6[%c5_234, %c2_235] : memref<8x8xf32, #tpu.memory_space<smem>>
    %513 = vector.broadcast %512 : f32 to vector<16x128xf32>
    %514 = arith.mulf %155, %513 : vector<16x128xf32>
    %c5_236 = arith.constant 5 : index
    %c3_237 = arith.constant 3 : index
    %515 = memref.load %arg6[%c5_236, %c3_237] : memref<8x8xf32, #tpu.memory_space<smem>>
    %516 = vector.broadcast %515 : f32 to vector<16x128xf32>
    %517 = arith.mulf %190, %516 : vector<16x128xf32>
    %c5_238 = arith.constant 5 : index
    %c4_239 = arith.constant 4 : index
    %518 = memref.load %arg6[%c5_238, %c4_239] : memref<8x8xf32, #tpu.memory_space<smem>>
    %519 = vector.broadcast %518 : f32 to vector<16x128xf32>
    %520 = arith.mulf %225, %519 : vector<16x128xf32>
    %c5_240 = arith.constant 5 : index
    %c5_241 = arith.constant 5 : index
    %521 = memref.load %arg6[%c5_240, %c5_241] : memref<8x8xf32, #tpu.memory_space<smem>>
    %522 = vector.broadcast %521 : f32 to vector<16x128xf32>
    %523 = arith.mulf %260, %522 : vector<16x128xf32>
    %c5_242 = arith.constant 5 : index
    %c6_243 = arith.constant 6 : index
    %524 = memref.load %arg6[%c5_242, %c6_243] : memref<8x8xf32, #tpu.memory_space<smem>>
    %525 = vector.broadcast %524 : f32 to vector<16x128xf32>
    %526 = arith.mulf %295, %525 : vector<16x128xf32>
    %c5_244 = arith.constant 5 : index
    %c7_245 = arith.constant 7 : index
    %527 = memref.load %arg6[%c5_244, %c7_245] : memref<8x8xf32, #tpu.memory_space<smem>>
    %528 = vector.broadcast %527 : f32 to vector<16x128xf32>
    %529 = arith.mulf %330, %528 : vector<16x128xf32>
    %530 = arith.addf %508, %511 : vector<16x128xf32>
    %531 = arith.addf %514, %517 : vector<16x128xf32>
    %532 = arith.addf %520, %523 : vector<16x128xf32>
    %533 = arith.addf %526, %529 : vector<16x128xf32>
    %534 = arith.addf %530, %531 : vector<16x128xf32>
    %535 = arith.addf %532, %533 : vector<16x128xf32>
    %536 = arith.addf %534, %535 : vector<16x128xf32>
    %c5_246 = arith.constant 5 : index
    %537 = memref.load %arg7[%c5_246] : memref<8xf32, #tpu.memory_space<smem>>
    %538 = vector.broadcast %537 : f32 to vector<16x128xf32>
    %539 = arith.addf %536, %538 : vector<16x128xf32>
    %540 = math.tanh %539 : vector<16x128xf32>
    %c6_247 = arith.constant 6 : index
    %c0_248 = arith.constant 0 : index
    %541 = memref.load %arg6[%c6_247, %c0_248] : memref<8x8xf32, #tpu.memory_space<smem>>
    %542 = vector.broadcast %541 : f32 to vector<16x128xf32>
    %543 = arith.mulf %85, %542 : vector<16x128xf32>
    %c6_249 = arith.constant 6 : index
    %c1_250 = arith.constant 1 : index
    %544 = memref.load %arg6[%c6_249, %c1_250] : memref<8x8xf32, #tpu.memory_space<smem>>
    %545 = vector.broadcast %544 : f32 to vector<16x128xf32>
    %546 = arith.mulf %120, %545 : vector<16x128xf32>
    %c6_251 = arith.constant 6 : index
    %c2_252 = arith.constant 2 : index
    %547 = memref.load %arg6[%c6_251, %c2_252] : memref<8x8xf32, #tpu.memory_space<smem>>
    %548 = vector.broadcast %547 : f32 to vector<16x128xf32>
    %549 = arith.mulf %155, %548 : vector<16x128xf32>
    %c6_253 = arith.constant 6 : index
    %c3_254 = arith.constant 3 : index
    %550 = memref.load %arg6[%c6_253, %c3_254] : memref<8x8xf32, #tpu.memory_space<smem>>
    %551 = vector.broadcast %550 : f32 to vector<16x128xf32>
    %552 = arith.mulf %190, %551 : vector<16x128xf32>
    %c6_255 = arith.constant 6 : index
    %c4_256 = arith.constant 4 : index
    %553 = memref.load %arg6[%c6_255, %c4_256] : memref<8x8xf32, #tpu.memory_space<smem>>
    %554 = vector.broadcast %553 : f32 to vector<16x128xf32>
    %555 = arith.mulf %225, %554 : vector<16x128xf32>
    %c6_257 = arith.constant 6 : index
    %c5_258 = arith.constant 5 : index
    %556 = memref.load %arg6[%c6_257, %c5_258] : memref<8x8xf32, #tpu.memory_space<smem>>
    %557 = vector.broadcast %556 : f32 to vector<16x128xf32>
    %558 = arith.mulf %260, %557 : vector<16x128xf32>
    %c6_259 = arith.constant 6 : index
    %c6_260 = arith.constant 6 : index
    %559 = memref.load %arg6[%c6_259, %c6_260] : memref<8x8xf32, #tpu.memory_space<smem>>
    %560 = vector.broadcast %559 : f32 to vector<16x128xf32>
    %561 = arith.mulf %295, %560 : vector<16x128xf32>
    %c6_261 = arith.constant 6 : index
    %c7_262 = arith.constant 7 : index
    %562 = memref.load %arg6[%c6_261, %c7_262] : memref<8x8xf32, #tpu.memory_space<smem>>
    %563 = vector.broadcast %562 : f32 to vector<16x128xf32>
    %564 = arith.mulf %330, %563 : vector<16x128xf32>
    %565 = arith.addf %543, %546 : vector<16x128xf32>
    %566 = arith.addf %549, %552 : vector<16x128xf32>
    %567 = arith.addf %555, %558 : vector<16x128xf32>
    %568 = arith.addf %561, %564 : vector<16x128xf32>
    %569 = arith.addf %565, %566 : vector<16x128xf32>
    %570 = arith.addf %567, %568 : vector<16x128xf32>
    %571 = arith.addf %569, %570 : vector<16x128xf32>
    %c6_263 = arith.constant 6 : index
    %572 = memref.load %arg7[%c6_263] : memref<8xf32, #tpu.memory_space<smem>>
    %573 = vector.broadcast %572 : f32 to vector<16x128xf32>
    %574 = arith.addf %571, %573 : vector<16x128xf32>
    %575 = math.tanh %574 : vector<16x128xf32>
    %c7_264 = arith.constant 7 : index
    %c0_265 = arith.constant 0 : index
    %576 = memref.load %arg6[%c7_264, %c0_265] : memref<8x8xf32, #tpu.memory_space<smem>>
    %577 = vector.broadcast %576 : f32 to vector<16x128xf32>
    %578 = arith.mulf %85, %577 : vector<16x128xf32>
    %c7_266 = arith.constant 7 : index
    %c1_267 = arith.constant 1 : index
    %579 = memref.load %arg6[%c7_266, %c1_267] : memref<8x8xf32, #tpu.memory_space<smem>>
    %580 = vector.broadcast %579 : f32 to vector<16x128xf32>
    %581 = arith.mulf %120, %580 : vector<16x128xf32>
    %c7_268 = arith.constant 7 : index
    %c2_269 = arith.constant 2 : index
    %582 = memref.load %arg6[%c7_268, %c2_269] : memref<8x8xf32, #tpu.memory_space<smem>>
    %583 = vector.broadcast %582 : f32 to vector<16x128xf32>
    %584 = arith.mulf %155, %583 : vector<16x128xf32>
    %c7_270 = arith.constant 7 : index
    %c3_271 = arith.constant 3 : index
    %585 = memref.load %arg6[%c7_270, %c3_271] : memref<8x8xf32, #tpu.memory_space<smem>>
    %586 = vector.broadcast %585 : f32 to vector<16x128xf32>
    %587 = arith.mulf %190, %586 : vector<16x128xf32>
    %c7_272 = arith.constant 7 : index
    %c4_273 = arith.constant 4 : index
    %588 = memref.load %arg6[%c7_272, %c4_273] : memref<8x8xf32, #tpu.memory_space<smem>>
    %589 = vector.broadcast %588 : f32 to vector<16x128xf32>
    %590 = arith.mulf %225, %589 : vector<16x128xf32>
    %c7_274 = arith.constant 7 : index
    %c5_275 = arith.constant 5 : index
    %591 = memref.load %arg6[%c7_274, %c5_275] : memref<8x8xf32, #tpu.memory_space<smem>>
    %592 = vector.broadcast %591 : f32 to vector<16x128xf32>
    %593 = arith.mulf %260, %592 : vector<16x128xf32>
    %c7_276 = arith.constant 7 : index
    %c6_277 = arith.constant 6 : index
    %594 = memref.load %arg6[%c7_276, %c6_277] : memref<8x8xf32, #tpu.memory_space<smem>>
    %595 = vector.broadcast %594 : f32 to vector<16x128xf32>
    %596 = arith.mulf %295, %595 : vector<16x128xf32>
    %c7_278 = arith.constant 7 : index
    %c7_279 = arith.constant 7 : index
    %597 = memref.load %arg6[%c7_278, %c7_279] : memref<8x8xf32, #tpu.memory_space<smem>>
    %598 = vector.broadcast %597 : f32 to vector<16x128xf32>
    %599 = arith.mulf %330, %598 : vector<16x128xf32>
    %600 = arith.addf %578, %581 : vector<16x128xf32>
    %601 = arith.addf %584, %587 : vector<16x128xf32>
    %602 = arith.addf %590, %593 : vector<16x128xf32>
    %603 = arith.addf %596, %599 : vector<16x128xf32>
    %604 = arith.addf %600, %601 : vector<16x128xf32>
    %605 = arith.addf %602, %603 : vector<16x128xf32>
    %606 = arith.addf %604, %605 : vector<16x128xf32>
    %c7_280 = arith.constant 7 : index
    %607 = memref.load %arg7[%c7_280] : memref<8xf32, #tpu.memory_space<smem>>
    %608 = vector.broadcast %607 : f32 to vector<16x128xf32>
    %609 = arith.addf %606, %608 : vector<16x128xf32>
    %610 = math.tanh %609 : vector<16x128xf32>
    %c0_281 = arith.constant 0 : index
    %c0_282 = arith.constant 0 : index
    %611 = memref.load %arg8[%c0_281, %c0_282] : memref<8x8xf32, #tpu.memory_space<smem>>
    %612 = vector.broadcast %611 : f32 to vector<16x128xf32>
    %613 = arith.mulf %365, %612 : vector<16x128xf32>
    %c0_283 = arith.constant 0 : index
    %c1_284 = arith.constant 1 : index
    %614 = memref.load %arg8[%c0_283, %c1_284] : memref<8x8xf32, #tpu.memory_space<smem>>
    %615 = vector.broadcast %614 : f32 to vector<16x128xf32>
    %616 = arith.mulf %400, %615 : vector<16x128xf32>
    %c0_285 = arith.constant 0 : index
    %c2_286 = arith.constant 2 : index
    %617 = memref.load %arg8[%c0_285, %c2_286] : memref<8x8xf32, #tpu.memory_space<smem>>
    %618 = vector.broadcast %617 : f32 to vector<16x128xf32>
    %619 = arith.mulf %435, %618 : vector<16x128xf32>
    %c0_287 = arith.constant 0 : index
    %c3_288 = arith.constant 3 : index
    %620 = memref.load %arg8[%c0_287, %c3_288] : memref<8x8xf32, #tpu.memory_space<smem>>
    %621 = vector.broadcast %620 : f32 to vector<16x128xf32>
    %622 = arith.mulf %470, %621 : vector<16x128xf32>
    %c0_289 = arith.constant 0 : index
    %c4_290 = arith.constant 4 : index
    %623 = memref.load %arg8[%c0_289, %c4_290] : memref<8x8xf32, #tpu.memory_space<smem>>
    %624 = vector.broadcast %623 : f32 to vector<16x128xf32>
    %625 = arith.mulf %505, %624 : vector<16x128xf32>
    %c0_291 = arith.constant 0 : index
    %c5_292 = arith.constant 5 : index
    %626 = memref.load %arg8[%c0_291, %c5_292] : memref<8x8xf32, #tpu.memory_space<smem>>
    %627 = vector.broadcast %626 : f32 to vector<16x128xf32>
    %628 = arith.mulf %540, %627 : vector<16x128xf32>
    %c0_293 = arith.constant 0 : index
    %c6_294 = arith.constant 6 : index
    %629 = memref.load %arg8[%c0_293, %c6_294] : memref<8x8xf32, #tpu.memory_space<smem>>
    %630 = vector.broadcast %629 : f32 to vector<16x128xf32>
    %631 = arith.mulf %575, %630 : vector<16x128xf32>
    %c0_295 = arith.constant 0 : index
    %c7_296 = arith.constant 7 : index
    %632 = memref.load %arg8[%c0_295, %c7_296] : memref<8x8xf32, #tpu.memory_space<smem>>
    %633 = vector.broadcast %632 : f32 to vector<16x128xf32>
    %634 = arith.mulf %610, %633 : vector<16x128xf32>
    %635 = arith.addf %613, %616 : vector<16x128xf32>
    %636 = arith.addf %619, %622 : vector<16x128xf32>
    %637 = arith.addf %625, %628 : vector<16x128xf32>
    %638 = arith.addf %631, %634 : vector<16x128xf32>
    %639 = arith.addf %635, %636 : vector<16x128xf32>
    %640 = arith.addf %637, %638 : vector<16x128xf32>
    %641 = arith.addf %639, %640 : vector<16x128xf32>
    %c0_297 = arith.constant 0 : index
    %642 = memref.load %arg9[%c0_297] : memref<8xf32, #tpu.memory_space<smem>>
    %643 = vector.broadcast %642 : f32 to vector<16x128xf32>
    %644 = arith.addf %641, %643 : vector<16x128xf32>
    %645 = math.tanh %644 : vector<16x128xf32>
    %c1_298 = arith.constant 1 : index
    %c0_299 = arith.constant 0 : index
    %646 = memref.load %arg8[%c1_298, %c0_299] : memref<8x8xf32, #tpu.memory_space<smem>>
    %647 = vector.broadcast %646 : f32 to vector<16x128xf32>
    %648 = arith.mulf %365, %647 : vector<16x128xf32>
    %c1_300 = arith.constant 1 : index
    %c1_301 = arith.constant 1 : index
    %649 = memref.load %arg8[%c1_300, %c1_301] : memref<8x8xf32, #tpu.memory_space<smem>>
    %650 = vector.broadcast %649 : f32 to vector<16x128xf32>
    %651 = arith.mulf %400, %650 : vector<16x128xf32>
    %c1_302 = arith.constant 1 : index
    %c2_303 = arith.constant 2 : index
    %652 = memref.load %arg8[%c1_302, %c2_303] : memref<8x8xf32, #tpu.memory_space<smem>>
    %653 = vector.broadcast %652 : f32 to vector<16x128xf32>
    %654 = arith.mulf %435, %653 : vector<16x128xf32>
    %c1_304 = arith.constant 1 : index
    %c3_305 = arith.constant 3 : index
    %655 = memref.load %arg8[%c1_304, %c3_305] : memref<8x8xf32, #tpu.memory_space<smem>>
    %656 = vector.broadcast %655 : f32 to vector<16x128xf32>
    %657 = arith.mulf %470, %656 : vector<16x128xf32>
    %c1_306 = arith.constant 1 : index
    %c4_307 = arith.constant 4 : index
    %658 = memref.load %arg8[%c1_306, %c4_307] : memref<8x8xf32, #tpu.memory_space<smem>>
    %659 = vector.broadcast %658 : f32 to vector<16x128xf32>
    %660 = arith.mulf %505, %659 : vector<16x128xf32>
    %c1_308 = arith.constant 1 : index
    %c5_309 = arith.constant 5 : index
    %661 = memref.load %arg8[%c1_308, %c5_309] : memref<8x8xf32, #tpu.memory_space<smem>>
    %662 = vector.broadcast %661 : f32 to vector<16x128xf32>
    %663 = arith.mulf %540, %662 : vector<16x128xf32>
    %c1_310 = arith.constant 1 : index
    %c6_311 = arith.constant 6 : index
    %664 = memref.load %arg8[%c1_310, %c6_311] : memref<8x8xf32, #tpu.memory_space<smem>>
    %665 = vector.broadcast %664 : f32 to vector<16x128xf32>
    %666 = arith.mulf %575, %665 : vector<16x128xf32>
    %c1_312 = arith.constant 1 : index
    %c7_313 = arith.constant 7 : index
    %667 = memref.load %arg8[%c1_312, %c7_313] : memref<8x8xf32, #tpu.memory_space<smem>>
    %668 = vector.broadcast %667 : f32 to vector<16x128xf32>
    %669 = arith.mulf %610, %668 : vector<16x128xf32>
    %670 = arith.addf %648, %651 : vector<16x128xf32>
    %671 = arith.addf %654, %657 : vector<16x128xf32>
    %672 = arith.addf %660, %663 : vector<16x128xf32>
    %673 = arith.addf %666, %669 : vector<16x128xf32>
    %674 = arith.addf %670, %671 : vector<16x128xf32>
    %675 = arith.addf %672, %673 : vector<16x128xf32>
    %676 = arith.addf %674, %675 : vector<16x128xf32>
    %c1_314 = arith.constant 1 : index
    %677 = memref.load %arg9[%c1_314] : memref<8xf32, #tpu.memory_space<smem>>
    %678 = vector.broadcast %677 : f32 to vector<16x128xf32>
    %679 = arith.addf %676, %678 : vector<16x128xf32>
    %680 = math.tanh %679 : vector<16x128xf32>
    %c2_315 = arith.constant 2 : index
    %c0_316 = arith.constant 0 : index
    %681 = memref.load %arg8[%c2_315, %c0_316] : memref<8x8xf32, #tpu.memory_space<smem>>
    %682 = vector.broadcast %681 : f32 to vector<16x128xf32>
    %683 = arith.mulf %365, %682 : vector<16x128xf32>
    %c2_317 = arith.constant 2 : index
    %c1_318 = arith.constant 1 : index
    %684 = memref.load %arg8[%c2_317, %c1_318] : memref<8x8xf32, #tpu.memory_space<smem>>
    %685 = vector.broadcast %684 : f32 to vector<16x128xf32>
    %686 = arith.mulf %400, %685 : vector<16x128xf32>
    %c2_319 = arith.constant 2 : index
    %c2_320 = arith.constant 2 : index
    %687 = memref.load %arg8[%c2_319, %c2_320] : memref<8x8xf32, #tpu.memory_space<smem>>
    %688 = vector.broadcast %687 : f32 to vector<16x128xf32>
    %689 = arith.mulf %435, %688 : vector<16x128xf32>
    %c2_321 = arith.constant 2 : index
    %c3_322 = arith.constant 3 : index
    %690 = memref.load %arg8[%c2_321, %c3_322] : memref<8x8xf32, #tpu.memory_space<smem>>
    %691 = vector.broadcast %690 : f32 to vector<16x128xf32>
    %692 = arith.mulf %470, %691 : vector<16x128xf32>
    %c2_323 = arith.constant 2 : index
    %c4_324 = arith.constant 4 : index
    %693 = memref.load %arg8[%c2_323, %c4_324] : memref<8x8xf32, #tpu.memory_space<smem>>
    %694 = vector.broadcast %693 : f32 to vector<16x128xf32>
    %695 = arith.mulf %505, %694 : vector<16x128xf32>
    %c2_325 = arith.constant 2 : index
    %c5_326 = arith.constant 5 : index
    %696 = memref.load %arg8[%c2_325, %c5_326] : memref<8x8xf32, #tpu.memory_space<smem>>
    %697 = vector.broadcast %696 : f32 to vector<16x128xf32>
    %698 = arith.mulf %540, %697 : vector<16x128xf32>
    %c2_327 = arith.constant 2 : index
    %c6_328 = arith.constant 6 : index
    %699 = memref.load %arg8[%c2_327, %c6_328] : memref<8x8xf32, #tpu.memory_space<smem>>
    %700 = vector.broadcast %699 : f32 to vector<16x128xf32>
    %701 = arith.mulf %575, %700 : vector<16x128xf32>
    %c2_329 = arith.constant 2 : index
    %c7_330 = arith.constant 7 : index
    %702 = memref.load %arg8[%c2_329, %c7_330] : memref<8x8xf32, #tpu.memory_space<smem>>
    %703 = vector.broadcast %702 : f32 to vector<16x128xf32>
    %704 = arith.mulf %610, %703 : vector<16x128xf32>
    %705 = arith.addf %683, %686 : vector<16x128xf32>
    %706 = arith.addf %689, %692 : vector<16x128xf32>
    %707 = arith.addf %695, %698 : vector<16x128xf32>
    %708 = arith.addf %701, %704 : vector<16x128xf32>
    %709 = arith.addf %705, %706 : vector<16x128xf32>
    %710 = arith.addf %707, %708 : vector<16x128xf32>
    %711 = arith.addf %709, %710 : vector<16x128xf32>
    %c2_331 = arith.constant 2 : index
    %712 = memref.load %arg9[%c2_331] : memref<8xf32, #tpu.memory_space<smem>>
    %713 = vector.broadcast %712 : f32 to vector<16x128xf32>
    %714 = arith.addf %711, %713 : vector<16x128xf32>
    %715 = math.tanh %714 : vector<16x128xf32>
    %c3_332 = arith.constant 3 : index
    %c0_333 = arith.constant 0 : index
    %716 = memref.load %arg8[%c3_332, %c0_333] : memref<8x8xf32, #tpu.memory_space<smem>>
    %717 = vector.broadcast %716 : f32 to vector<16x128xf32>
    %718 = arith.mulf %365, %717 : vector<16x128xf32>
    %c3_334 = arith.constant 3 : index
    %c1_335 = arith.constant 1 : index
    %719 = memref.load %arg8[%c3_334, %c1_335] : memref<8x8xf32, #tpu.memory_space<smem>>
    %720 = vector.broadcast %719 : f32 to vector<16x128xf32>
    %721 = arith.mulf %400, %720 : vector<16x128xf32>
    %c3_336 = arith.constant 3 : index
    %c2_337 = arith.constant 2 : index
    %722 = memref.load %arg8[%c3_336, %c2_337] : memref<8x8xf32, #tpu.memory_space<smem>>
    %723 = vector.broadcast %722 : f32 to vector<16x128xf32>
    %724 = arith.mulf %435, %723 : vector<16x128xf32>
    %c3_338 = arith.constant 3 : index
    %c3_339 = arith.constant 3 : index
    %725 = memref.load %arg8[%c3_338, %c3_339] : memref<8x8xf32, #tpu.memory_space<smem>>
    %726 = vector.broadcast %725 : f32 to vector<16x128xf32>
    %727 = arith.mulf %470, %726 : vector<16x128xf32>
    %c3_340 = arith.constant 3 : index
    %c4_341 = arith.constant 4 : index
    %728 = memref.load %arg8[%c3_340, %c4_341] : memref<8x8xf32, #tpu.memory_space<smem>>
    %729 = vector.broadcast %728 : f32 to vector<16x128xf32>
    %730 = arith.mulf %505, %729 : vector<16x128xf32>
    %c3_342 = arith.constant 3 : index
    %c5_343 = arith.constant 5 : index
    %731 = memref.load %arg8[%c3_342, %c5_343] : memref<8x8xf32, #tpu.memory_space<smem>>
    %732 = vector.broadcast %731 : f32 to vector<16x128xf32>
    %733 = arith.mulf %540, %732 : vector<16x128xf32>
    %c3_344 = arith.constant 3 : index
    %c6_345 = arith.constant 6 : index
    %734 = memref.load %arg8[%c3_344, %c6_345] : memref<8x8xf32, #tpu.memory_space<smem>>
    %735 = vector.broadcast %734 : f32 to vector<16x128xf32>
    %736 = arith.mulf %575, %735 : vector<16x128xf32>
    %c3_346 = arith.constant 3 : index
    %c7_347 = arith.constant 7 : index
    %737 = memref.load %arg8[%c3_346, %c7_347] : memref<8x8xf32, #tpu.memory_space<smem>>
    %738 = vector.broadcast %737 : f32 to vector<16x128xf32>
    %739 = arith.mulf %610, %738 : vector<16x128xf32>
    %740 = arith.addf %718, %721 : vector<16x128xf32>
    %741 = arith.addf %724, %727 : vector<16x128xf32>
    %742 = arith.addf %730, %733 : vector<16x128xf32>
    %743 = arith.addf %736, %739 : vector<16x128xf32>
    %744 = arith.addf %740, %741 : vector<16x128xf32>
    %745 = arith.addf %742, %743 : vector<16x128xf32>
    %746 = arith.addf %744, %745 : vector<16x128xf32>
    %c3_348 = arith.constant 3 : index
    %747 = memref.load %arg9[%c3_348] : memref<8xf32, #tpu.memory_space<smem>>
    %748 = vector.broadcast %747 : f32 to vector<16x128xf32>
    %749 = arith.addf %746, %748 : vector<16x128xf32>
    %750 = math.tanh %749 : vector<16x128xf32>
    %c4_349 = arith.constant 4 : index
    %c0_350 = arith.constant 0 : index
    %751 = memref.load %arg8[%c4_349, %c0_350] : memref<8x8xf32, #tpu.memory_space<smem>>
    %752 = vector.broadcast %751 : f32 to vector<16x128xf32>
    %753 = arith.mulf %365, %752 : vector<16x128xf32>
    %c4_351 = arith.constant 4 : index
    %c1_352 = arith.constant 1 : index
    %754 = memref.load %arg8[%c4_351, %c1_352] : memref<8x8xf32, #tpu.memory_space<smem>>
    %755 = vector.broadcast %754 : f32 to vector<16x128xf32>
    %756 = arith.mulf %400, %755 : vector<16x128xf32>
    %c4_353 = arith.constant 4 : index
    %c2_354 = arith.constant 2 : index
    %757 = memref.load %arg8[%c4_353, %c2_354] : memref<8x8xf32, #tpu.memory_space<smem>>
    %758 = vector.broadcast %757 : f32 to vector<16x128xf32>
    %759 = arith.mulf %435, %758 : vector<16x128xf32>
    %c4_355 = arith.constant 4 : index
    %c3_356 = arith.constant 3 : index
    %760 = memref.load %arg8[%c4_355, %c3_356] : memref<8x8xf32, #tpu.memory_space<smem>>
    %761 = vector.broadcast %760 : f32 to vector<16x128xf32>
    %762 = arith.mulf %470, %761 : vector<16x128xf32>
    %c4_357 = arith.constant 4 : index
    %c4_358 = arith.constant 4 : index
    %763 = memref.load %arg8[%c4_357, %c4_358] : memref<8x8xf32, #tpu.memory_space<smem>>
    %764 = vector.broadcast %763 : f32 to vector<16x128xf32>
    %765 = arith.mulf %505, %764 : vector<16x128xf32>
    %c4_359 = arith.constant 4 : index
    %c5_360 = arith.constant 5 : index
    %766 = memref.load %arg8[%c4_359, %c5_360] : memref<8x8xf32, #tpu.memory_space<smem>>
    %767 = vector.broadcast %766 : f32 to vector<16x128xf32>
    %768 = arith.mulf %540, %767 : vector<16x128xf32>
    %c4_361 = arith.constant 4 : index
    %c6_362 = arith.constant 6 : index
    %769 = memref.load %arg8[%c4_361, %c6_362] : memref<8x8xf32, #tpu.memory_space<smem>>
    %770 = vector.broadcast %769 : f32 to vector<16x128xf32>
    %771 = arith.mulf %575, %770 : vector<16x128xf32>
    %c4_363 = arith.constant 4 : index
    %c7_364 = arith.constant 7 : index
    %772 = memref.load %arg8[%c4_363, %c7_364] : memref<8x8xf32, #tpu.memory_space<smem>>
    %773 = vector.broadcast %772 : f32 to vector<16x128xf32>
    %774 = arith.mulf %610, %773 : vector<16x128xf32>
    %775 = arith.addf %753, %756 : vector<16x128xf32>
    %776 = arith.addf %759, %762 : vector<16x128xf32>
    %777 = arith.addf %765, %768 : vector<16x128xf32>
    %778 = arith.addf %771, %774 : vector<16x128xf32>
    %779 = arith.addf %775, %776 : vector<16x128xf32>
    %780 = arith.addf %777, %778 : vector<16x128xf32>
    %781 = arith.addf %779, %780 : vector<16x128xf32>
    %c4_365 = arith.constant 4 : index
    %782 = memref.load %arg9[%c4_365] : memref<8xf32, #tpu.memory_space<smem>>
    %783 = vector.broadcast %782 : f32 to vector<16x128xf32>
    %784 = arith.addf %781, %783 : vector<16x128xf32>
    %785 = math.tanh %784 : vector<16x128xf32>
    %c5_366 = arith.constant 5 : index
    %c0_367 = arith.constant 0 : index
    %786 = memref.load %arg8[%c5_366, %c0_367] : memref<8x8xf32, #tpu.memory_space<smem>>
    %787 = vector.broadcast %786 : f32 to vector<16x128xf32>
    %788 = arith.mulf %365, %787 : vector<16x128xf32>
    %c5_368 = arith.constant 5 : index
    %c1_369 = arith.constant 1 : index
    %789 = memref.load %arg8[%c5_368, %c1_369] : memref<8x8xf32, #tpu.memory_space<smem>>
    %790 = vector.broadcast %789 : f32 to vector<16x128xf32>
    %791 = arith.mulf %400, %790 : vector<16x128xf32>
    %c5_370 = arith.constant 5 : index
    %c2_371 = arith.constant 2 : index
    %792 = memref.load %arg8[%c5_370, %c2_371] : memref<8x8xf32, #tpu.memory_space<smem>>
    %793 = vector.broadcast %792 : f32 to vector<16x128xf32>
    %794 = arith.mulf %435, %793 : vector<16x128xf32>
    %c5_372 = arith.constant 5 : index
    %c3_373 = arith.constant 3 : index
    %795 = memref.load %arg8[%c5_372, %c3_373] : memref<8x8xf32, #tpu.memory_space<smem>>
    %796 = vector.broadcast %795 : f32 to vector<16x128xf32>
    %797 = arith.mulf %470, %796 : vector<16x128xf32>
    %c5_374 = arith.constant 5 : index
    %c4_375 = arith.constant 4 : index
    %798 = memref.load %arg8[%c5_374, %c4_375] : memref<8x8xf32, #tpu.memory_space<smem>>
    %799 = vector.broadcast %798 : f32 to vector<16x128xf32>
    %800 = arith.mulf %505, %799 : vector<16x128xf32>
    %c5_376 = arith.constant 5 : index
    %c5_377 = arith.constant 5 : index
    %801 = memref.load %arg8[%c5_376, %c5_377] : memref<8x8xf32, #tpu.memory_space<smem>>
    %802 = vector.broadcast %801 : f32 to vector<16x128xf32>
    %803 = arith.mulf %540, %802 : vector<16x128xf32>
    %c5_378 = arith.constant 5 : index
    %c6_379 = arith.constant 6 : index
    %804 = memref.load %arg8[%c5_378, %c6_379] : memref<8x8xf32, #tpu.memory_space<smem>>
    %805 = vector.broadcast %804 : f32 to vector<16x128xf32>
    %806 = arith.mulf %575, %805 : vector<16x128xf32>
    %c5_380 = arith.constant 5 : index
    %c7_381 = arith.constant 7 : index
    %807 = memref.load %arg8[%c5_380, %c7_381] : memref<8x8xf32, #tpu.memory_space<smem>>
    %808 = vector.broadcast %807 : f32 to vector<16x128xf32>
    %809 = arith.mulf %610, %808 : vector<16x128xf32>
    %810 = arith.addf %788, %791 : vector<16x128xf32>
    %811 = arith.addf %794, %797 : vector<16x128xf32>
    %812 = arith.addf %800, %803 : vector<16x128xf32>
    %813 = arith.addf %806, %809 : vector<16x128xf32>
    %814 = arith.addf %810, %811 : vector<16x128xf32>
    %815 = arith.addf %812, %813 : vector<16x128xf32>
    %816 = arith.addf %814, %815 : vector<16x128xf32>
    %c5_382 = arith.constant 5 : index
    %817 = memref.load %arg9[%c5_382] : memref<8xf32, #tpu.memory_space<smem>>
    %818 = vector.broadcast %817 : f32 to vector<16x128xf32>
    %819 = arith.addf %816, %818 : vector<16x128xf32>
    %820 = math.tanh %819 : vector<16x128xf32>
    %c6_383 = arith.constant 6 : index
    %c0_384 = arith.constant 0 : index
    %821 = memref.load %arg8[%c6_383, %c0_384] : memref<8x8xf32, #tpu.memory_space<smem>>
    %822 = vector.broadcast %821 : f32 to vector<16x128xf32>
    %823 = arith.mulf %365, %822 : vector<16x128xf32>
    %c6_385 = arith.constant 6 : index
    %c1_386 = arith.constant 1 : index
    %824 = memref.load %arg8[%c6_385, %c1_386] : memref<8x8xf32, #tpu.memory_space<smem>>
    %825 = vector.broadcast %824 : f32 to vector<16x128xf32>
    %826 = arith.mulf %400, %825 : vector<16x128xf32>
    %c6_387 = arith.constant 6 : index
    %c2_388 = arith.constant 2 : index
    %827 = memref.load %arg8[%c6_387, %c2_388] : memref<8x8xf32, #tpu.memory_space<smem>>
    %828 = vector.broadcast %827 : f32 to vector<16x128xf32>
    %829 = arith.mulf %435, %828 : vector<16x128xf32>
    %c6_389 = arith.constant 6 : index
    %c3_390 = arith.constant 3 : index
    %830 = memref.load %arg8[%c6_389, %c3_390] : memref<8x8xf32, #tpu.memory_space<smem>>
    %831 = vector.broadcast %830 : f32 to vector<16x128xf32>
    %832 = arith.mulf %470, %831 : vector<16x128xf32>
    %c6_391 = arith.constant 6 : index
    %c4_392 = arith.constant 4 : index
    %833 = memref.load %arg8[%c6_391, %c4_392] : memref<8x8xf32, #tpu.memory_space<smem>>
    %834 = vector.broadcast %833 : f32 to vector<16x128xf32>
    %835 = arith.mulf %505, %834 : vector<16x128xf32>
    %c6_393 = arith.constant 6 : index
    %c5_394 = arith.constant 5 : index
    %836 = memref.load %arg8[%c6_393, %c5_394] : memref<8x8xf32, #tpu.memory_space<smem>>
    %837 = vector.broadcast %836 : f32 to vector<16x128xf32>
    %838 = arith.mulf %540, %837 : vector<16x128xf32>
    %c6_395 = arith.constant 6 : index
    %c6_396 = arith.constant 6 : index
    %839 = memref.load %arg8[%c6_395, %c6_396] : memref<8x8xf32, #tpu.memory_space<smem>>
    %840 = vector.broadcast %839 : f32 to vector<16x128xf32>
    %841 = arith.mulf %575, %840 : vector<16x128xf32>
    %c6_397 = arith.constant 6 : index
    %c7_398 = arith.constant 7 : index
    %842 = memref.load %arg8[%c6_397, %c7_398] : memref<8x8xf32, #tpu.memory_space<smem>>
    %843 = vector.broadcast %842 : f32 to vector<16x128xf32>
    %844 = arith.mulf %610, %843 : vector<16x128xf32>
    %845 = arith.addf %823, %826 : vector<16x128xf32>
    %846 = arith.addf %829, %832 : vector<16x128xf32>
    %847 = arith.addf %835, %838 : vector<16x128xf32>
    %848 = arith.addf %841, %844 : vector<16x128xf32>
    %849 = arith.addf %845, %846 : vector<16x128xf32>
    %850 = arith.addf %847, %848 : vector<16x128xf32>
    %851 = arith.addf %849, %850 : vector<16x128xf32>
    %c6_399 = arith.constant 6 : index
    %852 = memref.load %arg9[%c6_399] : memref<8xf32, #tpu.memory_space<smem>>
    %853 = vector.broadcast %852 : f32 to vector<16x128xf32>
    %854 = arith.addf %851, %853 : vector<16x128xf32>
    %855 = math.tanh %854 : vector<16x128xf32>
    %c7_400 = arith.constant 7 : index
    %c0_401 = arith.constant 0 : index
    %856 = memref.load %arg8[%c7_400, %c0_401] : memref<8x8xf32, #tpu.memory_space<smem>>
    %857 = vector.broadcast %856 : f32 to vector<16x128xf32>
    %858 = arith.mulf %365, %857 : vector<16x128xf32>
    %c7_402 = arith.constant 7 : index
    %c1_403 = arith.constant 1 : index
    %859 = memref.load %arg8[%c7_402, %c1_403] : memref<8x8xf32, #tpu.memory_space<smem>>
    %860 = vector.broadcast %859 : f32 to vector<16x128xf32>
    %861 = arith.mulf %400, %860 : vector<16x128xf32>
    %c7_404 = arith.constant 7 : index
    %c2_405 = arith.constant 2 : index
    %862 = memref.load %arg8[%c7_404, %c2_405] : memref<8x8xf32, #tpu.memory_space<smem>>
    %863 = vector.broadcast %862 : f32 to vector<16x128xf32>
    %864 = arith.mulf %435, %863 : vector<16x128xf32>
    %c7_406 = arith.constant 7 : index
    %c3_407 = arith.constant 3 : index
    %865 = memref.load %arg8[%c7_406, %c3_407] : memref<8x8xf32, #tpu.memory_space<smem>>
    %866 = vector.broadcast %865 : f32 to vector<16x128xf32>
    %867 = arith.mulf %470, %866 : vector<16x128xf32>
    %c7_408 = arith.constant 7 : index
    %c4_409 = arith.constant 4 : index
    %868 = memref.load %arg8[%c7_408, %c4_409] : memref<8x8xf32, #tpu.memory_space<smem>>
    %869 = vector.broadcast %868 : f32 to vector<16x128xf32>
    %870 = arith.mulf %505, %869 : vector<16x128xf32>
    %c7_410 = arith.constant 7 : index
    %c5_411 = arith.constant 5 : index
    %871 = memref.load %arg8[%c7_410, %c5_411] : memref<8x8xf32, #tpu.memory_space<smem>>
    %872 = vector.broadcast %871 : f32 to vector<16x128xf32>
    %873 = arith.mulf %540, %872 : vector<16x128xf32>
    %c7_412 = arith.constant 7 : index
    %c6_413 = arith.constant 6 : index
    %874 = memref.load %arg8[%c7_412, %c6_413] : memref<8x8xf32, #tpu.memory_space<smem>>
    %875 = vector.broadcast %874 : f32 to vector<16x128xf32>
    %876 = arith.mulf %575, %875 : vector<16x128xf32>
    %c7_414 = arith.constant 7 : index
    %c7_415 = arith.constant 7 : index
    %877 = memref.load %arg8[%c7_414, %c7_415] : memref<8x8xf32, #tpu.memory_space<smem>>
    %878 = vector.broadcast %877 : f32 to vector<16x128xf32>
    %879 = arith.mulf %610, %878 : vector<16x128xf32>
    %880 = arith.addf %858, %861 : vector<16x128xf32>
    %881 = arith.addf %864, %867 : vector<16x128xf32>
    %882 = arith.addf %870, %873 : vector<16x128xf32>
    %883 = arith.addf %876, %879 : vector<16x128xf32>
    %884 = arith.addf %880, %881 : vector<16x128xf32>
    %885 = arith.addf %882, %883 : vector<16x128xf32>
    %886 = arith.addf %884, %885 : vector<16x128xf32>
    %c7_416 = arith.constant 7 : index
    %887 = memref.load %arg9[%c7_416] : memref<8xf32, #tpu.memory_space<smem>>
    %888 = vector.broadcast %887 : f32 to vector<16x128xf32>
    %889 = arith.addf %886, %888 : vector<16x128xf32>
    %890 = math.tanh %889 : vector<16x128xf32>
    %c0_417 = arith.constant 0 : index
    %891 = memref.load %arg10[%c0_417] : memref<8xf32, #tpu.memory_space<smem>>
    %892 = vector.broadcast %891 : f32 to vector<16x128xf32>
    %893 = arith.mulf %645, %892 : vector<16x128xf32>
    %c1_418 = arith.constant 1 : index
    %894 = memref.load %arg10[%c1_418] : memref<8xf32, #tpu.memory_space<smem>>
    %895 = vector.broadcast %894 : f32 to vector<16x128xf32>
    %896 = arith.mulf %680, %895 : vector<16x128xf32>
    %c2_419 = arith.constant 2 : index
    %897 = memref.load %arg10[%c2_419] : memref<8xf32, #tpu.memory_space<smem>>
    %898 = vector.broadcast %897 : f32 to vector<16x128xf32>
    %899 = arith.mulf %715, %898 : vector<16x128xf32>
    %c3_420 = arith.constant 3 : index
    %900 = memref.load %arg10[%c3_420] : memref<8xf32, #tpu.memory_space<smem>>
    %901 = vector.broadcast %900 : f32 to vector<16x128xf32>
    %902 = arith.mulf %750, %901 : vector<16x128xf32>
    %c4_421 = arith.constant 4 : index
    %903 = memref.load %arg10[%c4_421] : memref<8xf32, #tpu.memory_space<smem>>
    %904 = vector.broadcast %903 : f32 to vector<16x128xf32>
    %905 = arith.mulf %785, %904 : vector<16x128xf32>
    %c5_422 = arith.constant 5 : index
    %906 = memref.load %arg10[%c5_422] : memref<8xf32, #tpu.memory_space<smem>>
    %907 = vector.broadcast %906 : f32 to vector<16x128xf32>
    %908 = arith.mulf %820, %907 : vector<16x128xf32>
    %c6_423 = arith.constant 6 : index
    %909 = memref.load %arg10[%c6_423] : memref<8xf32, #tpu.memory_space<smem>>
    %910 = vector.broadcast %909 : f32 to vector<16x128xf32>
    %911 = arith.mulf %855, %910 : vector<16x128xf32>
    %c7_424 = arith.constant 7 : index
    %912 = memref.load %arg10[%c7_424] : memref<8xf32, #tpu.memory_space<smem>>
    %913 = vector.broadcast %912 : f32 to vector<16x128xf32>
    %914 = arith.mulf %890, %913 : vector<16x128xf32>
    %915 = arith.addf %893, %896 : vector<16x128xf32>
    %916 = arith.addf %899, %902 : vector<16x128xf32>
    %917 = arith.addf %905, %908 : vector<16x128xf32>
    %918 = arith.addf %911, %914 : vector<16x128xf32>
    %919 = arith.addf %915, %916 : vector<16x128xf32>
    %920 = arith.addf %917, %918 : vector<16x128xf32>
    %921 = arith.addf %919, %920 : vector<16x128xf32>
    %c0_425 = arith.constant 0 : index
    %922 = memref.load %arg11[%c0_425] : memref<1xf32, #tpu.memory_space<smem>>
    %923 = vector.broadcast %922 : f32 to vector<16x128xf32>
    %924 = arith.addf %921, %923 : vector<16x128xf32>
    %925 = arith.index_cast %0 : i32 to index
    %c0_426 = arith.constant 0 : index
    %926 = vector.load %arg12[%925, %c0_426] : memref<16x128xf32, #tpu.memory_space<vmem>>, vector<16x128xf32>
    tpu.vector_store %arg12[%925, %c0_426], %924 {strides = array<i32>} : memref<16x128xf32, #tpu.memory_space<vmem>>, vector<16x128xf32>,
    return
  }
  func.func @transform_0(%arg0: i32) -> (i32, i32) {
    %c0_i32 = arith.constant 0 : i32
    %c0_i32_0 = arith.constant 0 : i32
    return %arg0, %c0_i32 : i32, i32
  }
  func.func @transform_1(%arg0: i32) -> i32 {
    %c0_i32 = arith.constant 0 : i32
    %c0_i32_0 = arith.constant 0 : i32
    return %c0_i32 : i32
  }
  func.func @transform_2(%arg0: i32) -> i32 {
    %c0_i32 = arith.constant 0 : i32
    %c0_i32_0 = arith.constant 0 : i32
    return %c0_i32 : i32
  }
  func.func @transform_3(%arg0: i32) -> (i32, i32) {
    %c0_i32 = arith.constant 0 : i32
    %c0_i32_0 = arith.constant 0 : i32
    %c0_i32_1 = arith.constant 0 : i32
    return %c0_i32, %c0_i32_0 : i32, i32
  }
  func.func @transform_4(%arg0: i32) -> i32 {
    %c0_i32 = arith.constant 0 : i32
    %c0_i32_0 = arith.constant 0 : i32
    return %c0_i32 : i32
  }
  func.func @transform_5(%arg0: i32) -> (i32, i32) {
    %c0_i32 = arith.constant 0 : i32
    %c0_i32_0 = arith.constant 0 : i32
    %c0_i32_1 = arith.constant 0 : i32
    return %c0_i32, %c0_i32_0 : i32, i32
  }
  func.func @transform_6(%arg0: i32) -> i32 {
    %c0_i32 = arith.constant 0 : i32
    %c0_i32_0 = arith.constant 0 : i32
    return %c0_i32 : i32
  }
  func.func @transform_7(%arg0: i32) -> (i32, i32) {
    %c0_i32 = arith.constant 0 : i32
    %c0_i32_0 = arith.constant 0 : i32
    %c0_i32_1 = arith.constant 0 : i32
    return %c0_i32, %c0_i32_0 : i32, i32
  }
  func.func @transform_8(%arg0: i32) -> i32 {
    %c0_i32 = arith.constant 0 : i32
    %c0_i32_0 = arith.constant 0 : i32
    return %c0_i32 : i32
  }
  func.func @transform_9(%arg0: i32) -> i32 {
    %c0_i32 = arith.constant 0 : i32
    %c0_i32_0 = arith.constant 0 : i32
    return %c0_i32 : i32
  }
  func.func @transform_10(%arg0: i32) -> i32 {
    %c0_i32 = arith.constant 0 : i32
    %c0_i32_0 = arith.constant 0 : i32
    return %c0_i32 : i32
  }
  func.func @transform_11(%arg0: i32) -> (i32, i32) {
    %c0_i32 = arith.constant 0 : i32
    %c0_i32_0 = arith.constant 0 : i32
    return %arg0, %c0_i32 : i32, i32
  }
}

</mosaic_0001>

<llo_original>
// kernel: tpu_custom_call.1
$region0: #{tpu_custom_call.1}
  #allocation0 [shape = 'u32[]', space=smem, size = 0x4, offset = 0x4, fixed_abs, tag = 'smem constant byte address 0x4 - core index']
  #allocation1 [shape = 'u32[72,128]{1,0:T(1,128)}', space=vmem, size = 0x9000, scoped, tag = 'internal scratch']
  #allocation2 [shape = 'f32[1]{0:T(128)S(6)}', space=smem, size = 0x200, scoped, tag = 'scoped memory for tpu_custom_call.1']
  %s0 = inlined_call_operand.hbm [shape: f32[16,128], index: 0, kind: input, shape index: {}]
  %s1 = inlined_call_operand.hbm [shape: f32[8], index: 1, kind: input, shape index: {}]
  %s2 = inlined_call_operand.hbm [shape: f32[8], index: 2, kind: input, shape index: {}]
  %s3 = inlined_call_operand.hbm [shape: f32[8,8], index: 3, kind: input, shape index: {}]
  %s4 = inlined_call_operand.hbm [shape: f32[8], index: 4, kind: input, shape index: {}]
  %s5 = inlined_call_operand.hbm [shape: f32[8,8], index: 5, kind: input, shape index: {}]
  %s6 = inlined_call_operand.hbm [shape: f32[8], index: 6, kind: input, shape index: {}]
  %s7 = inlined_call_operand.vmem [shape: f32[8,8], index: 7, kind: input, shape index: {}]
  %s8 = inlined_call_operand.vmem [shape: f32[8], index: 8, kind: input, shape index: {}]
  %s9 = inlined_call_operand.vmem [shape: f32[8], index: 9, kind: input, shape index: {}]
  %s10 = inlined_call_operand.<no memory space> [shape: f32[1], index: 10, kind: input, shape index: {}]
  %s11 = inlined_call_operand.hbm [shape: f32[16,128], index: 11, kind: output, shape index: {}]
  %s12 = sld [smem:[#allocation0]]
  $region94: #{tpu_custom_call.1} parent=0
    _
  %s14 = ssub.s32 1, %s12
  %s15 = scalar_select 0, %s14, %s12
  %16 = sst [smem:[#allocation2]] %s10
  $region1: #{tpu_custom_call.1} parent=0
    #allocation3 [shape = 'u8[8192]{0}', space=vmem, size = 0x2000, scoped, tag = 'input window, operand 0, single buffered']
    #allocation4 [shape = 's32[1]{0}', space=sflag, size = 0x4, scoped, tag = 'scoped memory for tpu_custom_call.1']
    #allocation5 [shape = 's32[1]{0}', space=sflag, size = 0x4, scoped, tag = 'scoped memory for tpu_custom_call.1']
    #allocation6 [shape = 's32[1]{0}', space=sflag, size = 0x4, scoped, tag = 'scoped memory for tpu_custom_call.1']
    #allocation7 [shape = 's32[1]{0}', space=sflag, size = 0x4, scoped, tag = 'scoped memory for tpu_custom_call.1']
    #allocation8 [shape = 'u8[512]{0}', space=smem, size = 0x200, scoped, tag = 'input window, operand 1, single buffered']
    #allocation9 [shape = 'u8[512]{0}', space=smem, size = 0x200, scoped, tag = 'input window, operand 2, single buffered']
    #allocation10 [shape = 's32[1]{0}', space=sflag, size = 0x4, scoped, tag = 'scoped memory for tpu_custom_call.1']
    #allocation11 [shape = 'u8[4096]{0}', space=smem, size = 0x1000, scoped, tag = 'input window, operand 3, single buffered']
    #allocation12 [shape = 'u8[512]{0}', space=smem, size = 0x200, scoped, tag = 'input window, operand 4, single buffered']
    #allocation13 [shape = 's32[1]{0}', space=sflag, size = 0x4, scoped, tag = 'scoped memory for tpu_custom_call.1']
    #allocation14 [shape = 'u8[4096]{0}', space=smem, size = 0x1000, scoped, tag = 'input window, operand 5, single buffered']
    #allocation15 [shape = 'u8[512]{0}', space=smem, size = 0x200, scoped, tag = 'input window, operand 6, single buffered']
    #allocation16 [shape = 's32[1]{0}', space=sflag, size = 0x4, scoped, tag = 'scoped memory for tpu_custom_call.1']
    #allocation17 [shape = 'u8[4096]{0}', space=smem, size = 0x1000, scoped, tag = 'input window, operand 7, single buffered']
    #allocation18 [shape = 'u8[512]{0}', space=smem, size = 0x200, scoped, tag = 'input window, operand 8, single buffered']
    #allocation19 [shape = 's32[1]{0}', space=sflag, size = 0x4, scoped, tag = 'scoped memory for tpu_custom_call.1']
    #allocation20 [shape = 'u8[512]{0}', space=smem, size = 0x200, scoped, tag = 'input window, operand 9, single buffered']
    #allocation21 [shape = 'u8[8192]{0}', space=vmem, size = 0x2000, scoped, tag = 'output window, operand 0, single buffered']
    %17 = vsyncpa [#allocation4], 0
    %18 = vsyncpa [#allocation6], 0
    %19 = vsyncpa [#allocation10], 0
    %20 = vsyncpa [#allocation13], 0
    %21 = vsyncpa [#allocation16], 0
    %22 = vsyncpa [#allocation7], 0
    %23 = vsyncpa [#allocation19], 0
    %24 = vsyncpa [#allocation5], 0
    // Predicated region
    $region2: #{tpu_custom_call.1} parent=1 // pred_check
      _
    $region3: #{tpu_custom_call.1} parent=1 // pred_check_branch
      %26 = sbr.rel (0) target = $region5
    $region4: #{tpu_custom_call.1} parent=1 // pred_region
      %28 = vsyncadd [#allocation4], 0
      %s29 = sshll.u32 %s0, 4
      %s30 = int_to_ptr.hbm [resolvable:$true] %s29
      %s31 = sshll.u32 [#allocation3], 4
      %s32 = int_to_ptr.vmem [resolvable:$true] %s31
      %37 = dma.hbm_to_vmem [thread:$0]  %s30, 256, %s32, [#allocation4], 128, 128, 8
    $region5: #{tpu_custom_call.1} parent=1 // pred_fallthru
      _
    // Predicated region
    $region6: #{tpu_custom_call.1} parent=1 // pred_check
      _
    $region7: #{tpu_custom_call.1} parent=1 // pred_check_branch
      %39 = sbr.rel (0) target = $region9
    $region8: #{tpu_custom_call.1} parent=1 // pred_region
      %41 = vsyncadd [#allocation6], 0
      %s43 = sshll.u32 %s1, 4
      %s44 = int_to_ptr.hbm [resolvable:$true] %s43
      %46 = dma.hbm_to_smem %s44, 16, [#allocation8], [#allocation6]
    $region9: #{tpu_custom_call.1} parent=1 // pred_fallthru
      _
    // Predicated region
    $region10: #{tpu_custom_call.1} parent=1 // pred_check
      _
    $region11: #{tpu_custom_call.1} parent=1 // pred_check_branch
      %48 = sbr.rel (0) target = $region13
    $region12: #{tpu_custom_call.1} parent=1 // pred_region
      %50 = vsyncadd [#allocation10], 0
      %s52 = sshll.u32 %s2, 4
      %s53 = int_to_ptr.hbm [resolvable:$true] %s52
      %55 = dma.hbm_to_smem %s53, 16, [#allocation9], [#allocation10]
    $region13: #{tpu_custom_call.1} parent=1 // pred_fallthru
      _
    // Predicated region
    $region14: #{tpu_custom_call.1} parent=1 // pred_check
      _
    $region15: #{tpu_custom_call.1} parent=1 // pred_check_branch
      %57 = sbr.rel (0) target = $region17
    $region16: #{tpu_custom_call.1} parent=1 // pred_region
      %59 = vsyncadd [#allocation10], 0
      %s61 = sshll.u32 %s3, 4
      %s62 = int_to_ptr.hbm [resolvable:$true] %s61
      %64 = dma.hbm_to_smem %s62, 128, [#allocation11], [#allocation10]
    $region17: #{tpu_custom_call.1} parent=1 // pred_fallthru
      _
    // Predicated region
    $region18: #{tpu_custom_call.1} parent=1 // pred_check
      _
    $region19: #{tpu_custom_call.1} parent=1 // pred_check_branch
      %66 = sbr.rel (0) target = $region21
    $region20: #{tpu_custom_call.1} parent=1 // pred_region
      %68 = vsyncadd [#allocation13], 0
      %s70 = sshll.u32 %s4, 4
      %s71 = int_to_ptr.hbm [resolvable:$true] %s70
      %73 = dma.hbm_to_smem %s71, 16, [#allocation12], [#allocation13]
    $region21: #{tpu_custom_call.1} parent=1 // pred_fallthru
      _
    // Predicated region
    $region22: #{tpu_custom_call.1} parent=1 // pred_check
      _
    $region23: #{tpu_custom_call.1} parent=1 // pred_check_branch
      %75 = sbr.rel (0) target = $region25
    $region24: #{tpu_custom_call.1} parent=1 // pred_region
      %77 = vsyncadd [#allocation13], 0
      %s79 = sshll.u32 %s5, 4
      %s80 = int_to_ptr.hbm [resolvable:$true] %s79
      %82 = dma.hbm_to_smem %s80, 128, [#allocation14], [#allocation13]
    $region25: #{tpu_custom_call.1} parent=1 // pred_fallthru
      _
    // Predicated region
    $region26: #{tpu_custom_call.1} parent=1 // pred_check
      _
    $region27: #{tpu_custom_call.1} parent=1 // pred_check_branch
      %84 = sbr.rel (0) target = $region29
    $region28: #{tpu_custom_call.1} parent=1 // pred_region
      %86 = vsyncadd [#allocation16], 0
      %s88 = sshll.u32 %s6, 4
      %s89 = int_to_ptr.hbm [resolvable:$true] %s88
      %91 = dma.hbm_to_smem %s89, 16, [#allocation15], [#allocation16]
    $region29: #{tpu_custom_call.1} parent=1 // pred_fallthru
      _
    // Predicated region
    $region30: #{tpu_custom_call.1} parent=1 // pred_check
      _
    $region31: #{tpu_custom_call.1} parent=1 // pred_check_branch
      %93 = sbr.rel (0) target = $region33
    $region32: #{tpu_custom_call.1} parent=1 // pred_region
      %95 = vsyncadd [#allocation7], 0
      %s97 = sshll.u32 %s7, 4
      %s98 = int_to_ptr.vmem [resolvable:$true] %s97
      %100 = dma.vmem_to_smem %s98, 128, [#allocation17], [#allocation7]
    $region33: #{tpu_custom_call.1} parent=1 // pred_fallthru
      _
    // Predicated region
    $region34: #{tpu_custom_call.1} parent=1 // pred_check
      _
    $region35: #{tpu_custom_call.1} parent=1 // pred_check_branch
      %102 = sbr.rel (0) target = $region37
    $region36: #{tpu_custom_call.1} parent=1 // pred_region
      %104 = vsyncadd [#allocation19], 0
      %s106 = sshll.u32 %s8, 4
      %s107 = int_to_ptr.vmem [resolvable:$true] %s106
      %109 = dma.vmem_to_smem %s107, 16, [#allocation18], [#allocation19]
    $region37: #{tpu_custom_call.1} parent=1 // pred_fallthru
      _
    // Predicated region
    $region38: #{tpu_custom_call.1} parent=1 // pred_check
      _
    $region39: #{tpu_custom_call.1} parent=1 // pred_check_branch
      %111 = sbr.rel (0) target = $region41
    $region40: #{tpu_custom_call.1} parent=1 // pred_region
      %113 = vsyncadd [#allocation19], 0
      %s115 = sshll.u32 %s9, 4
      %s116 = int_to_ptr.vmem [resolvable:$true] %s115
      %118 = dma.vmem_to_smem %s116, 16, [#allocation20], [#allocation19]
    $region41: #{tpu_custom_call.1} parent=1 // pred_fallthru
      _
    // Predicated region
    $region42: #{tpu_custom_call.1} parent=1 // pred_check
      _
    $region43: #{tpu_custom_call.1} parent=1 // pred_check_branch
      %120 = sbr.rel (0) target = $region45
    $region44: #{tpu_custom_call.1} parent=1 // pred_region
      _
    $region45: #{tpu_custom_call.1} parent=1 // pred_fallthru
      _
    // Predicated region
    $region46: #{tpu_custom_call.1} parent=1 // pred_check
      _
    $region47: #{tpu_custom_call.1} parent=1 // pred_check_branch
      %122 = sbr.rel (0) target = $region49
    $region48: #{tpu_custom_call.1} parent=1 // pred_region
      %124 = dma.done [#allocation4], 256
    $region49: #{tpu_custom_call.1} parent=1 // pred_fallthru
      _
    // Predicated region
    $region50: #{tpu_custom_call.1} parent=1 // pred_check
      _
    $region51: #{tpu_custom_call.1} parent=1 // pred_check_branch
      %126 = sbr.rel (0) target = $region53
    $region52: #{tpu_custom_call.1} parent=1 // pred_region
      %128 = dma.done [#allocation6], 16
    $region53: #{tpu_custom_call.1} parent=1 // pred_fallthru
      _
    // Predicated region
    $region54: #{tpu_custom_call.1} parent=1 // pred_check
      _
    $region55: #{tpu_custom_call.1} parent=1 // pred_check_branch
      %130 = sbr.rel (0) target = $region57
    $region56: #{tpu_custom_call.1} parent=1 // pred_region
      %132 = dma.done [#allocation10], 16
    $region57: #{tpu_custom_call.1} parent=1 // pred_fallthru
      _
    // Predicated region
    $region58: #{tpu_custom_call.1} parent=1 // pred_check
      _
    $region59: #{tpu_custom_call.1} parent=1 // pred_check_branch
      %134 = sbr.rel (0) target = $region61
    $region60: #{tpu_custom_call.1} parent=1 // pred_region
      %136 = dma.done [#allocation10], 128
    $region61: #{tpu_custom_call.1} parent=1 // pred_fallthru
      _
    // Predicated region
    $region62: #{tpu_custom_call.1} parent=1 // pred_check
      _
    $region63: #{tpu_custom_call.1} parent=1 // pred_check_branch
      %138 = sbr.rel (0) target = $region65
    $region64: #{tpu_custom_call.1} parent=1 // pred_region
      %140 = dma.done [#allocation13], 16
    $region65: #{tpu_custom_call.1} parent=1 // pred_fallthru
      _
    // Predicated region
    $region66: #{tpu_custom_call.1} parent=1 // pred_check
      _
    $region67: #{tpu_custom_call.1} parent=1 // pred_check_branch
      %142 = sbr.rel (0) target = $region69
    $region68: #{tpu_custom_call.1} parent=1 // pred_region
      %144 = dma.done [#allocation13], 128
    $region69: #{tpu_custom_call.1} parent=1 // pred_fallthru
      _
    // Predicated region
    $region70: #{tpu_custom_call.1} parent=1 // pred_check
      _
    $region71: #{tpu_custom_call.1} parent=1 // pred_check_branch
      %146 = sbr.rel (0) target = $region73
    $region72: #{tpu_custom_call.1} parent=1 // pred_region
      %148 = dma.done [#allocation16], 16
    $region73: #{tpu_custom_call.1} parent=1 // pred_fallthru
      _
    // Predicated region
    $region74: #{tpu_custom_call.1} parent=1 // pred_check
      _
    $region75: #{tpu_custom_call.1} parent=1 // pred_check_branch
      %150 = sbr.rel (0) target = $region77
    $region76: #{tpu_custom_call.1} parent=1 // pred_region
      %152 = dma.done [#allocation7], 128
    $region77: #{tpu_custom_call.1} parent=1 // pred_fallthru
      _
    // Predicated region
    $region78: #{tpu_custom_call.1} parent=1 // pred_check
      _
    $region79: #{tpu_custom_call.1} parent=1 // pred_check_branch
      %154 = sbr.rel (0) target = $region81
    $region80: #{tpu_custom_call.1} parent=1 // pred_region
      %156 = dma.done [#allocation19], 16
    $region81: #{tpu_custom_call.1} parent=1 // pred_fallthru
      _
    // Predicated region
    $region82: #{tpu_custom_call.1} parent=1 // pred_check
      _
    $region83: #{tpu_custom_call.1} parent=1 // pred_check_branch
      %158 = sbr.rel (0) target = $region85
    $region84: #{tpu_custom_call.1} parent=1 // pred_region
      %160 = dma.done [#allocation19], 16
    $region85: #{tpu_custom_call.1} parent=1 // pred_fallthru
      _
    %161 = sfence
    %v162 = vld [vmem:[#allocation3] sm:$0xff]
    %v163 = vld [vmem:[#allocation3 + $0x8] sm:$0xff]
    %s164 = sld [smem:[#allocation8]]
    %v165 = vstv %s164
    %v166 = vmul.f32 %v162, %v165
    %v167 = vmul.f32 %v163, %v165
    %s168 = sld [smem:[#allocation9]]
    %v169 = vstv %s168
    %v170 = vadd.f32 %v166, %v169
    %v171 = vadd.f32 %v167, %v169
    %s172 = sld [smem:[#allocation8 + $0x1]]
    %v173 = vstv %s172
    %v174 = vmul.f32 %v162, %v173
    %v175 = vmul.f32 %v163, %v173
    %s176 = sld [smem:[#allocation9 + $0x1]]
    %v177 = vstv %s176
    %v178 = vadd.f32 %v174, %v177
    %v179 = vadd.f32 %v175, %v177
    %s180 = sld [smem:[#allocation8 + $0x2]]
    %v181 = vstv %s180
    %v182 = vmul.f32 %v162, %v181
    %v183 = vmul.f32 %v163, %v181
    %s184 = sld [smem:[#allocation9 + $0x2]]
    %v185 = vstv %s184
    %v186 = vadd.f32 %v182, %v185
    %v187 = vadd.f32 %v183, %v185
    %s188 = sld [smem:[#allocation8 + $0x3]]
    %v189 = vstv %s188
    %v190 = vmul.f32 %v162, %v189
    %v191 = vmul.f32 %v163, %v189
    %s192 = sld [smem:[#allocation9 + $0x3]]
    %v193 = vstv %s192
    %v194 = vadd.f32 %v190, %v193
    %v195 = vadd.f32 %v191, %v193
    %s196 = sld [smem:[#allocation8 + $0x4]]
    %v197 = vstv %s196
    %v198 = vmul.f32 %v162, %v197
    %v199 = vmul.f32 %v163, %v197
    %s200 = sld [smem:[#allocation9 + $0x4]]
    %v201 = vstv %s200
    %v202 = vadd.f32 %v198, %v201
    %v203 = vadd.f32 %v199, %v201
    %s204 = sld [smem:[#allocation8 + $0x5]]
    %v205 = vstv %s204
    %v206 = vmul.f32 %v162, %v205
    %v207 = vmul.f32 %v163, %v205
    %s208 = sld [smem:[#allocation9 + $0x5]]
    %v209 = vstv %s208
    %v210 = vadd.f32 %v206, %v209
    %v211 = vadd.f32 %v207, %v209
    %s212 = sld [smem:[#allocation8 + $0x6]]
    %v213 = vstv %s212
    %v214 = vmul.f32 %v162, %v213
    %v215 = vmul.f32 %v163, %v213
    %s216 = sld [smem:[#allocation9 + $0x6]]
    %v217 = vstv %s216
    %v218 = vadd.f32 %v214, %v217
    %v219 = vadd.f32 %v215, %v217
    %s220 = sld [smem:[#allocation8 + $0x7]]
    %v221 = vstv %s220
    %v222 = vmul.f32 %v162, %v221
    %v223 = vmul.f32 %v163, %v221
    %s224 = sld [smem:[#allocation9 + $0x7]]
    %v225 = vstv %s224
    %v226 = vadd.f32 %v222, %v225
    %v227 = vadd.f32 %v223, %v225
    %s228 = sld [smem:[#allocation11]]
    %v229 = vstv %s228
    %v230 = vmul.f32 %v170, %v229
    %v231 = vmul.f32 %v171, %v229
    %s232 = sld [smem:[#allocation11 + $0x1]]
    %v233 = vstv %s232
    %v234 = vmul.f32 %v178, %v233
    %v235 = vmul.f32 %v179, %v233
    %s236 = sld [smem:[#allocation11 + $0x2]]
    %v237 = vstv %s236
    %v238 = vmul.f32 %v186, %v237
    %v239 = vmul.f32 %v187, %v237
    %s240 = sld [smem:[#allocation11 + $0x3]]
    %v241 = vstv %s240
    %v242 = vmul.f32 %v194, %v241
    %v243 = vmul.f32 %v195, %v241
    %s244 = sld [smem:[#allocation11 + $0x4]]
    %v245 = vstv %s244
    %v246 = vmul.f32 %v202, %v245
    %v247 = vmul.f32 %v203, %v245
    %s248 = sld [smem:[#allocation11 + $0x5]]
    %v249 = vstv %s248
    %v250 = vmul.f32 %v210, %v249
    %v251 = vmul.f32 %v211, %v249
    %s252 = sld [smem:[#allocation11 + $0x6]]
    %v253 = vstv %s252
    %v254 = vmul.f32 %v218, %v253
    %v255 = vmul.f32 %v219, %v253
    %s256 = sld [smem:[#allocation11 + $0x7]]
    %v257 = vstv %s256
    %v258 = vmul.f32 %v226, %v257
    %v259 = vmul.f32 %v227, %v257
    %v260 = vadd.f32 %v230, %v234
    %v261 = vadd.f32 %v231, %v235
    %v262 = vadd.f32 %v238, %v242
    %v263 = vadd.f32 %v239, %v243
    %v264 = vadd.f32 %v246, %v250
    %v265 = vadd.f32 %v247, %v251
    %v266 = vadd.f32 %v254, %v258
    %v267 = vadd.f32 %v255, %v259
    %v268 = vadd.f32 %v260, %v262
    %v269 = vadd.f32 %v261, %v263
    %v270 = vadd.f32 %v264, %v266
    %v271 = vadd.f32 %v265, %v267
    %v272 = vadd.f32 %v268, %v270
    %v273 = vadd.f32 %v269, %v271
    %s274 = sld [smem:[#allocation12]]
    %v275 = vstv %s274
    %v276 = vadd.f32 %v272, %v275
    %v277 = vadd.f32 %v273, %v275
    %v278 = vtanh.pop %v276
    %v279 = vtanh.pop %v277
    %s280 = sld [smem:[#allocation11 + $0x80]]
    %v281 = vstv %s280
    %v282 = vmul.f32 %v170, %v281
    %v283 = vmul.f32 %v171, %v281
    %s284 = sld [smem:[#allocation11 + $0x81]]
    %v285 = vstv %s284
    %v286 = vmul.f32 %v178, %v285
    %v287 = vmul.f32 %v179, %v285
    %s288 = sld [smem:[#allocation11 + $0x82]]
    %v289 = vstv %s288
    %v290 = vmul.f32 %v186, %v289
    %v291 = vmul.f32 %v187, %v289
    %s292 = sld [smem:[#allocation11 + $0x83]]
    %v293 = vstv %s292
    %v294 = vmul.f32 %v194, %v293
    %v295 = vmul.f32 %v195, %v293
    %s296 = sld [smem:[#allocation11 + $0x84]]
    %v297 = vstv %s296
    %v298 = vmul.f32 %v202, %v297
    %v299 = vmul.f32 %v203, %v297
    %s300 = sld [smem:[#allocation11 + $0x85]]
    %v301 = vstv %s300
    %v302 = vmul.f32 %v210, %v301
    %v303 = vmul.f32 %v211, %v301
    %s304 = sld [smem:[#allocation11 + $0x86]]
    %v305 = vstv %s304
    %v306 = vmul.f32 %v218, %v305
    %v307 = vmul.f32 %v219, %v305
    %s308 = sld [smem:[#allocation11 + $0x87]]
    %v309 = vstv %s308
    %v310 = vmul.f32 %v226, %v309
    %v311 = vmul.f32 %v227, %v309
    %v312 = vadd.f32 %v282, %v286
    %v313 = vadd.f32 %v283, %v287
    %v314 = vadd.f32 %v290, %v294
    %v315 = vadd.f32 %v291, %v295
    %v316 = vadd.f32 %v298, %v302
    %v317 = vadd.f32 %v299, %v303
    %v318 = vadd.f32 %v306, %v310
    %v319 = vadd.f32 %v307, %v311
    %v320 = vadd.f32 %v312, %v314
    %v321 = vadd.f32 %v313, %v315
    %v322 = vadd.f32 %v316, %v318
    %v323 = vadd.f32 %v317, %v319
    %v324 = vadd.f32 %v320, %v322
    %v325 = vadd.f32 %v321, %v323
    %s326 = sld [smem:[#allocation12 + $0x1]]
    %v327 = vstv %s326
    %v328 = vadd.f32 %v324, %v327
    %v329 = vadd.f32 %v325, %v327
    %v330 = vtanh.pop %v328
    %v331 = vtanh.pop %v329
    %s332 = sld [smem:[#allocation11 + $0x100]]
    %v333 = vstv %s332
    %v334 = vmul.f32 %v170, %v333
    %v335 = vmul.f32 %v171, %v333
    %s336 = sld [smem:[#allocation11 + $0x101]]
    %v337 = vstv %s336
    %v338 = vmul.f32 %v178, %v337
    %v339 = vmul.f32 %v179, %v337
    %s340 = sld [smem:[#allocation11 + $0x102]]
    %v341 = vstv %s340
    %v342 = vmul.f32 %v186, %v341
    %v343 = vmul.f32 %v187, %v341
    %s344 = sld [smem:[#allocation11 + $0x103]]
    %v345 = vstv %s344
    %v346 = vmul.f32 %v194, %v345
    %v347 = vmul.f32 %v195, %v345
    %s348 = sld [smem:[#allocation11 + $0x104]]
    %v349 = vstv %s348
    %v350 = vmul.f32 %v202, %v349
    %v351 = vmul.f32 %v203, %v349
    %s352 = sld [smem:[#allocation11 + $0x105]]
    %v353 = vstv %s352
    %v354 = vmul.f32 %v210, %v353
    %v355 = vmul.f32 %v211, %v353
    %s356 = sld [smem:[#allocation11 + $0x106]]
    %v357 = vstv %s356
    %v358 = vmul.f32 %v218, %v357
    %v359 = vmul.f32 %v219, %v357
    %s360 = sld [smem:[#allocation11 + $0x107]]
    %v361 = vstv %s360
    %v362 = vmul.f32 %v226, %v361
    %v363 = vmul.f32 %v227, %v361
    %v364 = vadd.f32 %v334, %v338
    %v365 = vadd.f32 %v335, %v339
    %v366 = vadd.f32 %v342, %v346
    %v367 = vadd.f32 %v343, %v347
    %v368 = vadd.f32 %v350, %v354
    %v369 = vadd.f32 %v351, %v355
    %v370 = vadd.f32 %v358, %v362
    %v371 = vadd.f32 %v359, %v363
    %v372 = vadd.f32 %v364, %v366
    %v373 = vadd.f32 %v365, %v367
    %v374 = vadd.f32 %v368, %v370
    %v375 = vadd.f32 %v369, %v371
    %v376 = vadd.f32 %v372, %v374
    %v377 = vadd.f32 %v373, %v375
    %s378 = sld [smem:[#allocation12 + $0x2]]
    %v379 = vstv %s378
    %v380 = vadd.f32 %v376, %v379
    %v381 = vadd.f32 %v377, %v379
    %v382 = vtanh.pop %v380
    %v383 = vtanh.pop %v381
    %s384 = sld [smem:[#allocation11 + $0x180]]
    %v385 = vstv %s384
    %v386 = vmul.f32 %v170, %v385
    %v387 = vmul.f32 %v171, %v385
    %s388 = sld [smem:[#allocation11 + $0x181]]
    %v389 = vstv %s388
    %v390 = vmul.f32 %v178, %v389
    %v391 = vmul.f32 %v179, %v389
    %s392 = sld [smem:[#allocation11 + $0x182]]
    %v393 = vstv %s392
    %v394 = vmul.f32 %v186, %v393
    %v395 = vmul.f32 %v187, %v393
    %s396 = sld [smem:[#allocation11 + $0x183]]
    %v397 = vstv %s396
    %v398 = vmul.f32 %v194, %v397
    %v399 = vmul.f32 %v195, %v397
    %s400 = sld [smem:[#allocation11 + $0x184]]
    %v401 = vstv %s400
    %v402 = vmul.f32 %v202, %v401
    %v403 = vmul.f32 %v203, %v401
    %s404 = sld [smem:[#allocation11 + $0x185]]
    %v405 = vstv %s404
    %v406 = vmul.f32 %v210, %v405
    %v407 = vmul.f32 %v211, %v405
    %s408 = sld [smem:[#allocation11 + $0x186]]
    %v409 = vstv %s408
    %v410 = vmul.f32 %v218, %v409
    %v411 = vmul.f32 %v219, %v409
    %s412 = sld [smem:[#allocation11 + $0x187]]
    %v413 = vstv %s412
    %v414 = vmul.f32 %v226, %v413
    %v415 = vmul.f32 %v227, %v413
    %v416 = vadd.f32 %v386, %v390
    %v417 = vadd.f32 %v387, %v391
    %v418 = vadd.f32 %v394, %v398
    %v419 = vadd.f32 %v395, %v399
    %v420 = vadd.f32 %v402, %v406
    %v421 = vadd.f32 %v403, %v407
    %v422 = vadd.f32 %v410, %v414
    %v423 = vadd.f32 %v411, %v415
    %v424 = vadd.f32 %v416, %v418
    %v425 = vadd.f32 %v417, %v419
    %v426 = vadd.f32 %v420, %v422
    %v427 = vadd.f32 %v421, %v423
    %v428 = vadd.f32 %v424, %v426
    %v429 = vadd.f32 %v425, %v427
    %s430 = sld [smem:[#allocation12 + $0x3]]
    %v431 = vstv %s430
    %v432 = vadd.f32 %v428, %v431
    %v433 = vadd.f32 %v429, %v431
    %v434 = vtanh.pop %v432
    %v435 = vtanh.pop %v433
    %s436 = sld [smem:[#allocation11 + $0x200]]
    %v437 = vstv %s436
    %v438 = vmul.f32 %v170, %v437
    %v439 = vmul.f32 %v171, %v437
    %s440 = sld [smem:[#allocation11 + $0x201]]
    %v441 = vstv %s440
    %v442 = vmul.f32 %v178, %v441
    %v443 = vmul.f32 %v179, %v441
    %s444 = sld [smem:[#allocation11 + $0x202]]
    %v445 = vstv %s444
    %v446 = vmul.f32 %v186, %v445
    %v447 = vmul.f32 %v187, %v445
    %s448 = sld [smem:[#allocation11 + $0x203]]
    %v449 = vstv %s448
    %v450 = vmul.f32 %v194, %v449
    %v451 = vmul.f32 %v195, %v449
    %s452 = sld [smem:[#allocation11 + $0x204]]
    %v453 = vstv %s452
    %v454 = vmul.f32 %v202, %v453
    %v455 = vmul.f32 %v203, %v453
    %s456 = sld [smem:[#allocation11 + $0x205]]
    %v457 = vstv %s456
    %v458 = vmul.f32 %v210, %v457
    %v459 = vmul.f32 %v211, %v457
    %s460 = sld [smem:[#allocation11 + $0x206]]
    %v461 = vstv %s460
    %v462 = vmul.f32 %v218, %v461
    %v463 = vmul.f32 %v219, %v461
    %s464 = sld [smem:[#allocation11 + $0x207]]
    %v465 = vstv %s464
    %v466 = vmul.f32 %v226, %v465
    %v467 = vmul.f32 %v227, %v465
    %v468 = vadd.f32 %v438, %v442
    %v469 = vadd.f32 %v439, %v443
    %v470 = vadd.f32 %v446, %v450
    %v471 = vadd.f32 %v447, %v451
    %v472 = vadd.f32 %v454, %v458
    %v473 = vadd.f32 %v455, %v459
    %v474 = vadd.f32 %v462, %v466
    %v475 = vadd.f32 %v463, %v467
    %v476 = vadd.f32 %v468, %v470
    %v477 = vadd.f32 %v469, %v471
    %v478 = vadd.f32 %v472, %v474
    %v479 = vadd.f32 %v473, %v475
    %v480 = vadd.f32 %v476, %v478
    %v481 = vadd.f32 %v477, %v479
    %s482 = sld [smem:[#allocation12 + $0x4]]
    %v483 = vstv %s482
    %v484 = vadd.f32 %v480, %v483
    %v485 = vadd.f32 %v481, %v483
    %v486 = vtanh.pop %v484
    %v487 = vtanh.pop %v485
    %s488 = sld [smem:[#allocation11 + $0x280]]
    %v489 = vstv %s488
    %v490 = vmul.f32 %v170, %v489
    %v491 = vmul.f32 %v171, %v489
    %s492 = sld [smem:[#allocation11 + $0x281]]
    %v493 = vstv %s492
    %v494 = vmul.f32 %v178, %v493
    %v495 = vmul.f32 %v179, %v493
    %s496 = sld [smem:[#allocation11 + $0x282]]
    %v497 = vstv %s496
    %v498 = vmul.f32 %v186, %v497
    %v499 = vmul.f32 %v187, %v497
    %s500 = sld [smem:[#allocation11 + $0x283]]
    %v501 = vstv %s500
    %v502 = vmul.f32 %v194, %v501
    %v503 = vmul.f32 %v195, %v501
    %s504 = sld [smem:[#allocation11 + $0x284]]
    %v505 = vstv %s504
    %v506 = vmul.f32 %v202, %v505
    %v507 = vmul.f32 %v203, %v505
    %s508 = sld [smem:[#allocation11 + $0x285]]
    %v509 = vstv %s508
    %v510 = vmul.f32 %v210, %v509
    %v511 = vmul.f32 %v211, %v509
    %s512 = sld [smem:[#allocation11 + $0x286]]
    %v513 = vstv %s512
    %v514 = vmul.f32 %v218, %v513
    %v515 = vmul.f32 %v219, %v513
    %s516 = sld [smem:[#allocation11 + $0x287]]
    %v517 = vstv %s516
    %v518 = vmul.f32 %v226, %v517
    %v519 = vmul.f32 %v227, %v517
    %v520 = vadd.f32 %v490, %v494
    %v521 = vadd.f32 %v491, %v495
    %v522 = vadd.f32 %v498, %v502
    %v523 = vadd.f32 %v499, %v503
    %v524 = vadd.f32 %v506, %v510
    %v525 = vadd.f32 %v507, %v511
    %v526 = vadd.f32 %v514, %v518
    %v527 = vadd.f32 %v515, %v519
    %v528 = vadd.f32 %v520, %v522
    %v529 = vadd.f32 %v521, %v523
    %v530 = vadd.f32 %v524, %v526
    %v531 = vadd.f32 %v525, %v527
    %v532 = vadd.f32 %v528, %v530
    %v533 = vadd.f32 %v529, %v531
    %s534 = sld [smem:[#allocation12 + $0x5]]
    %v535 = vstv %s534
    %v536 = vadd.f32 %v532, %v535
    %v537 = vadd.f32 %v533, %v535
    %v538 = vtanh.pop %v536
    %v539 = vtanh.pop %v537
    %s540 = sld [smem:[#allocation11 + $0x300]]
    %v541 = vstv %s540
    %v542 = vmul.f32 %v170, %v541
    %v543 = vmul.f32 %v171, %v541
    %s544 = sld [smem:[#allocation11 + $0x301]]
    %v545 = vstv %s544
    %v546 = vmul.f32 %v178, %v545
    %v547 = vmul.f32 %v179, %v545
    %s548 = sld [smem:[#allocation11 + $0x302]]
    %v549 = vstv %s548
    %v550 = vmul.f32 %v186, %v549
    %v551 = vmul.f32 %v187, %v549
    %s552 = sld [smem:[#allocation11 + $0x303]]
    %v553 = vstv %s552
    %v554 = vmul.f32 %v194, %v553
    %v555 = vmul.f32 %v195, %v553
    %s556 = sld [smem:[#allocation11 + $0x304]]
    %v557 = vstv %s556
    %v558 = vmul.f32 %v202, %v557
    %v559 = vmul.f32 %v203, %v557
    %s560 = sld [smem:[#allocation11 + $0x305]]
    %v561 = vstv %s560
    %v562 = vmul.f32 %v210, %v561
    %v563 = vmul.f32 %v211, %v561
    %s564 = sld [smem:[#allocation11 + $0x306]]
    %v565 = vstv %s564
    %v566 = vmul.f32 %v218, %v565
    %v567 = vmul.f32 %v219, %v565
    %s568 = sld [smem:[#allocation11 + $0x307]]
    %v569 = vstv %s568
    %v570 = vmul.f32 %v226, %v569
    %v571 = vmul.f32 %v227, %v569
    %v572 = vadd.f32 %v542, %v546
    %v573 = vadd.f32 %v543, %v547
    %v574 = vadd.f32 %v550, %v554
    %v575 = vadd.f32 %v551, %v555
    %v576 = vadd.f32 %v558, %v562
    %v577 = vadd.f32 %v559, %v563
    %v578 = vadd.f32 %v566, %v570
    %v579 = vadd.f32 %v567, %v571
    %v580 = vadd.f32 %v572, %v574
    %v581 = vadd.f32 %v573, %v575
    %v582 = vadd.f32 %v576, %v578
    %v583 = vadd.f32 %v577, %v579
    %v584 = vadd.f32 %v580, %v582
    %v585 = vadd.f32 %v581, %v583
    %s586 = sld [smem:[#allocation12 + $0x6]]
    %v587 = vstv %s586
    %v588 = vadd.f32 %v584, %v587
    %v589 = vadd.f32 %v585, %v587
    %v590 = vtanh.pop %v588
    %v591 = vtanh.pop %v589
    %s592 = sld [smem:[#allocation11 + $0x380]]
    %v593 = vstv %s592
    %v594 = vmul.f32 %v170, %v593
    %v595 = vmul.f32 %v171, %v593
    %s596 = sld [smem:[#allocation11 + $0x381]]
    %v597 = vstv %s596
    %v598 = vmul.f32 %v178, %v597
    %v599 = vmul.f32 %v179, %v597
    %s600 = sld [smem:[#allocation11 + $0x382]]
    %v601 = vstv %s600
    %v602 = vmul.f32 %v186, %v601
    %v603 = vmul.f32 %v187, %v601
    %s604 = sld [smem:[#allocation11 + $0x383]]
    %v605 = vstv %s604
    %v606 = vmul.f32 %v194, %v605
    %v607 = vmul.f32 %v195, %v605
    %s608 = sld [smem:[#allocation11 + $0x384]]
    %v609 = vstv %s608
    %v610 = vmul.f32 %v202, %v609
    %v611 = vmul.f32 %v203, %v609
    %s612 = sld [smem:[#allocation11 + $0x385]]
    %v613 = vstv %s612
    %v614 = vmul.f32 %v210, %v613
    %v615 = vmul.f32 %v211, %v613
    %s616 = sld [smem:[#allocation11 + $0x386]]
    %v617 = vstv %s616
    %v618 = vmul.f32 %v218, %v617
    %v619 = vmul.f32 %v219, %v617
    %s620 = sld [smem:[#allocation11 + $0x387]]
    %v621 = vstv %s620
    %v622 = vmul.f32 %v226, %v621
    %v623 = vmul.f32 %v227, %v621
    %v624 = vadd.f32 %v594, %v598
    %v625 = vadd.f32 %v595, %v599
    %v626 = vadd.f32 %v602, %v606
    %v627 = vadd.f32 %v603, %v607
    %v628 = vadd.f32 %v610, %v614
    %v629 = vadd.f32 %v611, %v615
    %v630 = vadd.f32 %v618, %v622
    %v631 = vadd.f32 %v619, %v623
    %v632 = vadd.f32 %v624, %v626
    %v633 = vadd.f32 %v625, %v627
    %v634 = vadd.f32 %v628, %v630
    %v635 = vadd.f32 %v629, %v631
    %v636 = vadd.f32 %v632, %v634
    %v637 = vadd.f32 %v633, %v635
    %s638 = sld [smem:[#allocation12 + $0x7]]
    %v639 = vstv %s638
    %v640 = vadd.f32 %v636, %v639
    %v641 = vadd.f32 %v637, %v639
    %v642 = vtanh.pop %v640
    %v643 = vtanh.pop %v641
    %s644 = sld [smem:[#allocation14]]
    %v645 = vstv %s644
    %v646 = vmul.f32 %v278, %v645
    %v647 = vmul.f32 %v279, %v645
    %s648 = sld [smem:[#allocation14 + $0x1]]
    %v649 = vstv %s648
    %v650 = vmul.f32 %v330, %v649
    %v651 = vmul.f32 %v331, %v649
    %s652 = sld [smem:[#allocation14 + $0x2]]
    %v653 = vstv %s652
    %v654 = vmul.f32 %v382, %v653
    %v655 = vmul.f32 %v383, %v653
    %s656 = sld [smem:[#allocation14 + $0x3]]
    %v657 = vstv %s656
    %v658 = vmul.f32 %v434, %v657
    %v659 = vmul.f32 %v435, %v657
    %s660 = sld [smem:[#allocation14 + $0x4]]
    %v661 = vstv %s660
    %v662 = vmul.f32 %v486, %v661
    %v663 = vmul.f32 %v487, %v661
    %s664 = sld [smem:[#allocation14 + $0x5]]
    %v665 = vstv %s664
    %v666 = vmul.f32 %v538, %v665
    %v667 = vmul.f32 %v539, %v665
    %s668 = sld [smem:[#allocation14 + $0x6]]
    %v669 = vstv %s668
    %v670 = vmul.f32 %v590, %v669
    %v671 = vmul.f32 %v591, %v669
    %s672 = sld [smem:[#allocation14 + $0x7]]
    %v673 = vstv %s672
    %v674 = vmul.f32 %v642, %v673
    %v675 = vmul.f32 %v643, %v673
    %v676 = vadd.f32 %v646, %v650
    %v677 = vadd.f32 %v647, %v651
    %v678 = vadd.f32 %v654, %v658
    %v679 = vadd.f32 %v655, %v659
    %v680 = vadd.f32 %v662, %v666
    %v681 = vadd.f32 %v663, %v667
    %v682 = vadd.f32 %v670, %v674
    %v683 = vadd.f32 %v671, %v675
    %v684 = vadd.f32 %v676, %v678
    %v685 = vadd.f32 %v677, %v679
    %v686 = vadd.f32 %v680, %v682
    %v687 = vadd.f32 %v681, %v683
    %v688 = vadd.f32 %v684, %v686
    %v689 = vadd.f32 %v685, %v687
    %s690 = sld [smem:[#allocation15]]
    %v691 = vstv %s690
    %v692 = vadd.f32 %v688, %v691
    %v693 = vadd.f32 %v689, %v691
    %v694 = vtanh.pop %v692
    %v695 = vtanh.pop %v693
    %s696 = sld [smem:[#allocation14 + $0x80]]
    %v697 = vstv %s696
    %v698 = vmul.f32 %v278, %v697
    %v699 = vmul.f32 %v279, %v697
    %s700 = sld [smem:[#allocation14 + $0x81]]
    %v701 = vstv %s700
    %v702 = vmul.f32 %v330, %v701
    %v703 = vmul.f32 %v331, %v701
    %s704 = sld [smem:[#allocation14 + $0x82]]
    %v705 = vstv %s704
    %v706 = vmul.f32 %v382, %v705
    %v707 = vmul.f32 %v383, %v705
    %s708 = sld [smem:[#allocation14 + $0x83]]
    %v709 = vstv %s708
    %v710 = vmul.f32 %v434, %v709
    %v711 = vmul.f32 %v435, %v709
    %s712 = sld [smem:[#allocation14 + $0x84]]
    %v713 = vstv %s712
    %v714 = vmul.f32 %v486, %v713
    %v715 = vmul.f32 %v487, %v713
    %s716 = sld [smem:[#allocation14 + $0x85]]
    %v717 = vstv %s716
    %v718 = vmul.f32 %v538, %v717
    %v719 = vmul.f32 %v539, %v717
    %s720 = sld [smem:[#allocation14 + $0x86]]
    %v721 = vstv %s720
    %v722 = vmul.f32 %v590, %v721
    %v723 = vmul.f32 %v591, %v721
    %s724 = sld [smem:[#allocation14 + $0x87]]
    %v725 = vstv %s724
    %v726 = vmul.f32 %v642, %v725
    %v727 = vmul.f32 %v643, %v725
    %v728 = vadd.f32 %v698, %v702
    %v729 = vadd.f32 %v699, %v703
    %v730 = vadd.f32 %v706, %v710
    %v731 = vadd.f32 %v707, %v711
    %v732 = vadd.f32 %v714, %v718
    %v733 = vadd.f32 %v715, %v719
    %v734 = vadd.f32 %v722, %v726
    %v735 = vadd.f32 %v723, %v727
    %v736 = vadd.f32 %v728, %v730
    %v737 = vadd.f32 %v729, %v731
    %v738 = vadd.f32 %v732, %v734
    %v739 = vadd.f32 %v733, %v735
    %v740 = vadd.f32 %v736, %v738
    %v741 = vadd.f32 %v737, %v739
    %s742 = sld [smem:[#allocation15 + $0x1]]
    %v743 = vstv %s742
    %v744 = vadd.f32 %v740, %v743
    %v745 = vadd.f32 %v741, %v743
    %v746 = vtanh.pop %v744
    %v747 = vtanh.pop %v745
    %s748 = sld [smem:[#allocation14 + $0x100]]
    %v749 = vstv %s748
    %v750 = vmul.f32 %v278, %v749
    %v751 = vmul.f32 %v279, %v749
    %s752 = sld [smem:[#allocation14 + $0x101]]
    %v753 = vstv %s752
    %v754 = vmul.f32 %v330, %v753
    %v755 = vmul.f32 %v331, %v753
    %s756 = sld [smem:[#allocation14 + $0x102]]
    %v757 = vstv %s756
    %v758 = vmul.f32 %v382, %v757
    %v759 = vmul.f32 %v383, %v757
    %s760 = sld [smem:[#allocation14 + $0x103]]
    %v761 = vstv %s760
    %v762 = vmul.f32 %v434, %v761
    %v763 = vmul.f32 %v435, %v761
    %s764 = sld [smem:[#allocation14 + $0x104]]
    %v765 = vstv %s764
    %v766 = vmul.f32 %v486, %v765
    %v767 = vmul.f32 %v487, %v765
    %s768 = sld [smem:[#allocation14 + $0x105]]
    %v769 = vstv %s768
    %v770 = vmul.f32 %v538, %v769
    %v771 = vmul.f32 %v539, %v769
    %s772 = sld [smem:[#allocation14 + $0x106]]
    %v773 = vstv %s772
    %v774 = vmul.f32 %v590, %v773
    %v775 = vmul.f32 %v591, %v773
    %s776 = sld [smem:[#allocation14 + $0x107]]
    %v777 = vstv %s776
    %v778 = vmul.f32 %v642, %v777
    %v779 = vmul.f32 %v643, %v777
    %v780 = vadd.f32 %v750, %v754
    %v781 = vadd.f32 %v751, %v755
    %v782 = vadd.f32 %v758, %v762
    %v783 = vadd.f32 %v759, %v763
    %v784 = vadd.f32 %v766, %v770
    %v785 = vadd.f32 %v767, %v771
    %v786 = vadd.f32 %v774, %v778
    %v787 = vadd.f32 %v775, %v779
    %v788 = vadd.f32 %v780, %v782
    %v789 = vadd.f32 %v781, %v783
    %v790 = vadd.f32 %v784, %v786
    %v791 = vadd.f32 %v785, %v787
    %v792 = vadd.f32 %v788, %v790
    %v793 = vadd.f32 %v789, %v791
    %s794 = sld [smem:[#allocation15 + $0x2]]
    %v795 = vstv %s794
    %v796 = vadd.f32 %v792, %v795
    %v797 = vadd.f32 %v793, %v795
    %v798 = vtanh.pop %v796
    %v799 = vtanh.pop %v797
    %s800 = sld [smem:[#allocation14 + $0x180]]
    %v801 = vstv %s800
    %v802 = vmul.f32 %v278, %v801
    %v803 = vmul.f32 %v279, %v801
    %s804 = sld [smem:[#allocation14 + $0x181]]
    %v805 = vstv %s804
    %v806 = vmul.f32 %v330, %v805
    %v807 = vmul.f32 %v331, %v805
    %s808 = sld [smem:[#allocation14 + $0x182]]
    %v809 = vstv %s808
    %v810 = vmul.f32 %v382, %v809
    %v811 = vmul.f32 %v383, %v809
    %s812 = sld [smem:[#allocation14 + $0x183]]
    %v813 = vstv %s812
    %v814 = vmul.f32 %v434, %v813
    %v815 = vmul.f32 %v435, %v813
    %s816 = sld [smem:[#allocation14 + $0x184]]
    %v817 = vstv %s816
    %v818 = vmul.f32 %v486, %v817
    %v819 = vmul.f32 %v487, %v817
    %s820 = sld [smem:[#allocation14 + $0x185]]
    %v821 = vstv %s820
    %v822 = vmul.f32 %v538, %v821
    %v823 = vmul.f32 %v539, %v821
    %s824 = sld [smem:[#allocation14 + $0x186]]
    %v825 = vstv %s824
    %v826 = vmul.f32 %v590, %v825
    %v827 = vmul.f32 %v591, %v825
    %s828 = sld [smem:[#allocation14 + $0x187]]
    %v829 = vstv %s828
    %v830 = vmul.f32 %v642, %v829
    %v831 = vmul.f32 %v643, %v829
    %v832 = vadd.f32 %v802, %v806
    %v833 = vadd.f32 %v803, %v807
    %v834 = vadd.f32 %v810, %v814
    %v835 = vadd.f32 %v811, %v815
    %v836 = vadd.f32 %v818, %v822
    %v837 = vadd.f32 %v819, %v823
    %v838 = vadd.f32 %v826, %v830
    %v839 = vadd.f32 %v827, %v831
    %v840 = vadd.f32 %v832, %v834
    %v841 = vadd.f32 %v833, %v835
    %v842 = vadd.f32 %v836, %v838
    %v843 = vadd.f32 %v837, %v839
    %v844 = vadd.f32 %v840, %v842
    %v845 = vadd.f32 %v841, %v843
    %s846 = sld [smem:[#allocation15 + $0x3]]
    %v847 = vstv %s846
    %v848 = vadd.f32 %v844, %v847
    %v849 = vadd.f32 %v845, %v847
    %v850 = vtanh.pop %v848
    %v851 = vtanh.pop %v849
    %s852 = sld [smem:[#allocation14 + $0x200]]
    %v853 = vstv %s852
    %v854 = vmul.f32 %v278, %v853
    %v855 = vmul.f32 %v279, %v853
    %s856 = sld [smem:[#allocation14 + $0x201]]
    %v857 = vstv %s856
    %v858 = vmul.f32 %v330, %v857
    %v859 = vmul.f32 %v331, %v857
    %s860 = sld [smem:[#allocation14 + $0x202]]
    %v861 = vstv %s860
    %v862 = vmul.f32 %v382, %v861
    %v863 = vmul.f32 %v383, %v861
    %s864 = sld [smem:[#allocation14 + $0x203]]
    %v865 = vstv %s864
    %v866 = vmul.f32 %v434, %v865
    %v867 = vmul.f32 %v435, %v865
    %s868 = sld [smem:[#allocation14 + $0x204]]
    %v869 = vstv %s868
    %v870 = vmul.f32 %v486, %v869
    %v871 = vmul.f32 %v487, %v869
    %s872 = sld [smem:[#allocation14 + $0x205]]
    %v873 = vstv %s872
    %v874 = vmul.f32 %v538, %v873
    %v875 = vmul.f32 %v539, %v873
    %s876 = sld [smem:[#allocation14 + $0x206]]
    %v877 = vstv %s876
    %v878 = vmul.f32 %v590, %v877
    %v879 = vmul.f32 %v591, %v877
    %s880 = sld [smem:[#allocation14 + $0x207]]
    %v881 = vstv %s880
    %v882 = vmul.f32 %v642, %v881
    %v883 = vmul.f32 %v643, %v881
    %v884 = vadd.f32 %v854, %v858
    %v885 = vadd.f32 %v855, %v859
    %v886 = vadd.f32 %v862, %v866
    %v887 = vadd.f32 %v863, %v867
    %v888 = vadd.f32 %v870, %v874
    %v889 = vadd.f32 %v871, %v875
    %v890 = vadd.f32 %v878, %v882
    %v891 = vadd.f32 %v879, %v883
    %v892 = vadd.f32 %v884, %v886
    %v893 = vadd.f32 %v885, %v887
    %v894 = vadd.f32 %v888, %v890
    %v895 = vadd.f32 %v889, %v891
    %v896 = vadd.f32 %v892, %v894
    %v897 = vadd.f32 %v893, %v895
    %s898 = sld [smem:[#allocation15 + $0x4]]
    %v899 = vstv %s898
    %v900 = vadd.f32 %v896, %v899
    %v901 = vadd.f32 %v897, %v899
    %v902 = vtanh.pop %v900
    %v903 = vtanh.pop %v901
    %s904 = sld [smem:[#allocation14 + $0x280]]
    %v905 = vstv %s904
    %v906 = vmul.f32 %v278, %v905
    %v907 = vmul.f32 %v279, %v905
    %s908 = sld [smem:[#allocation14 + $0x281]]
    %v909 = vstv %s908
    %v910 = vmul.f32 %v330, %v909
    %v911 = vmul.f32 %v331, %v909
    %s912 = sld [smem:[#allocation14 + $0x282]]
    %v913 = vstv %s912
    %v914 = vmul.f32 %v382, %v913
    %v915 = vmul.f32 %v383, %v913
    %s916 = sld [smem:[#allocation14 + $0x283]]
    %v917 = vstv %s916
    %v918 = vmul.f32 %v434, %v917
    %v919 = vmul.f32 %v435, %v917
    %s920 = sld [smem:[#allocation14 + $0x284]]
    %v921 = vstv %s920
    %v922 = vmul.f32 %v486, %v921
    %v923 = vmul.f32 %v487, %v921
    %s924 = sld [smem:[#allocation14 + $0x285]]
    %v925 = vstv %s924
    %v926 = vmul.f32 %v538, %v925
    %v927 = vmul.f32 %v539, %v925
    %s928 = sld [smem:[#allocation14 + $0x286]]
    %v929 = vstv %s928
    %v930 = vmul.f32 %v590, %v929
    %v931 = vmul.f32 %v591, %v929
    %s932 = sld [smem:[#allocation14 + $0x287]]
    %v933 = vstv %s932
    %v934 = vmul.f32 %v642, %v933
    %v935 = vmul.f32 %v643, %v933
    %v936 = vadd.f32 %v906, %v910
    %v937 = vadd.f32 %v907, %v911
    %v938 = vadd.f32 %v914, %v918
    %v939 = vadd.f32 %v915, %v919
    %v940 = vadd.f32 %v922, %v926
    %v941 = vadd.f32 %v923, %v927
    %v942 = vadd.f32 %v930, %v934
    %v943 = vadd.f32 %v931, %v935
    %v944 = vadd.f32 %v936, %v938
    %v945 = vadd.f32 %v937, %v939
    %v946 = vadd.f32 %v940, %v942
    %v947 = vadd.f32 %v941, %v943
    %v948 = vadd.f32 %v944, %v946
    %v949 = vadd.f32 %v945, %v947
    %s950 = sld [smem:[#allocation15 + $0x5]]
    %v951 = vstv %s950
    %v952 = vadd.f32 %v948, %v951
    %v953 = vadd.f32 %v949, %v951
    %v954 = vtanh.pop %v952
    %v955 = vtanh.pop %v953
    %s956 = sld [smem:[#allocation14 + $0x300]]
    %v957 = vstv %s956
    %v958 = vmul.f32 %v278, %v957
    %v959 = vmul.f32 %v279, %v957
    %s960 = sld [smem:[#allocation14 + $0x301]]
    %v961 = vstv %s960
    %v962 = vmul.f32 %v330, %v961
    %v963 = vmul.f32 %v331, %v961
    %s964 = sld [smem:[#allocation14 + $0x302]]
    %v965 = vstv %s964
    %v966 = vmul.f32 %v382, %v965
    %v967 = vmul.f32 %v383, %v965
    %s968 = sld [smem:[#allocation14 + $0x303]]
    %v969 = vstv %s968
    %v970 = vmul.f32 %v434, %v969
    %v971 = vmul.f32 %v435, %v969
    %s972 = sld [smem:[#allocation14 + $0x304]]
    %v973 = vstv %s972
    %v974 = vmul.f32 %v486, %v973
    %v975 = vmul.f32 %v487, %v973
    %s976 = sld [smem:[#allocation14 + $0x305]]
    %v977 = vstv %s976
    %v978 = vmul.f32 %v538, %v977
    %v979 = vmul.f32 %v539, %v977
    %s980 = sld [smem:[#allocation14 + $0x306]]
    %v981 = vstv %s980
    %v982 = vmul.f32 %v590, %v981
    %v983 = vmul.f32 %v591, %v981
    %s984 = sld [smem:[#allocation14 + $0x307]]
    %v985 = vstv %s984
    %v986 = vmul.f32 %v642, %v985
    %v987 = vmul.f32 %v643, %v985
    %v988 = vadd.f32 %v958, %v962
    %v989 = vadd.f32 %v959, %v963
    %v990 = vadd.f32 %v966, %v970
    %v991 = vadd.f32 %v967, %v971
    %v992 = vadd.f32 %v974, %v978
    %v993 = vadd.f32 %v975, %v979
    %v994 = vadd.f32 %v982, %v986
    %v995 = vadd.f32 %v983, %v987
    %v996 = vadd.f32 %v988, %v990
    %v997 = vadd.f32 %v989, %v991
    %v998 = vadd.f32 %v992, %v994
    %v999 = vadd.f32 %v993, %v995
    %v1000 = vadd.f32 %v996, %v998
    %v1001 = vadd.f32 %v997, %v999
    %s1002 = sld [smem:[#allocation15 + $0x6]]
    %v1003 = vstv %s1002
    %v1004 = vadd.f32 %v1000, %v1003
    %v1005 = vadd.f32 %v1001, %v1003
    %v1006 = vtanh.pop %v1004
    %v1007 = vtanh.pop %v1005
    %s1008 = sld [smem:[#allocation14 + $0x380]]
    %v1009 = vstv %s1008
    %v1010 = vmul.f32 %v278, %v1009
    %v1011 = vmul.f32 %v279, %v1009
    %s1012 = sld [smem:[#allocation14 + $0x381]]
    %v1013 = vstv %s1012
    %v1014 = vmul.f32 %v330, %v1013
    %v1015 = vmul.f32 %v331, %v1013
    %s1016 = sld [smem:[#allocation14 + $0x382]]
    %v1017 = vstv %s1016
    %v1018 = vmul.f32 %v382, %v1017
    %v1019 = vmul.f32 %v383, %v1017
    %s1020 = sld [smem:[#allocation14 + $0x383]]
    %v1021 = vstv %s1020
    %v1022 = vmul.f32 %v434, %v1021
    %v1023 = vmul.f32 %v435, %v1021
    %s1024 = sld [smem:[#allocation14 + $0x384]]
    %v1025 = vstv %s1024
    %v1026 = vmul.f32 %v486, %v1025
    %v1027 = vmul.f32 %v487, %v1025
    %s1028 = sld [smem:[#allocation14 + $0x385]]
    %v1029 = vstv %s1028
    %v1030 = vmul.f32 %v538, %v1029
    %v1031 = vmul.f32 %v539, %v1029
    %s1032 = sld [smem:[#allocation14 + $0x386]]
    %v1033 = vstv %s1032
    %v1034 = vmul.f32 %v590, %v1033
    %v1035 = vmul.f32 %v591, %v1033
    %s1036 = sld [smem:[#allocation14 + $0x387]]
    %v1037 = vstv %s1036
    %v1038 = vmul.f32 %v642, %v1037
    %v1039 = vmul.f32 %v643, %v1037
    %v1040 = vadd.f32 %v1010, %v1014
    %v1041 = vadd.f32 %v1011, %v1015
    %v1042 = vadd.f32 %v1018, %v1022
    %v1043 = vadd.f32 %v1019, %v1023
    %v1044 = vadd.f32 %v1026, %v1030
    %v1045 = vadd.f32 %v1027, %v1031
    %v1046 = vadd.f32 %v1034, %v1038
    %v1047 = vadd.f32 %v1035, %v1039
    %v1048 = vadd.f32 %v1040, %v1042
    %v1049 = vadd.f32 %v1041, %v1043
    %v1050 = vadd.f32 %v1044, %v1046
    %v1051 = vadd.f32 %v1045, %v1047
    %v1052 = vadd.f32 %v1048, %v1050
    %v1053 = vadd.f32 %v1049, %v1051
    %s1054 = sld [smem:[#allocation15 + $0x7]]
    %v1055 = vstv %s1054
    %v1056 = vadd.f32 %v1052, %v1055
    %v1057 = vadd.f32 %v1053, %v1055
    %v1058 = vtanh.pop %v1056
    %v1059 = vtanh.pop %v1057
    %s1060 = sld [smem:[#allocation17]]
    %v1061 = vstv %s1060
    %v1062 = vmul.f32 %v694, %v1061
    %v1063 = vmul.f32 %v695, %v1061
    %s1064 = sld [smem:[#allocation17 + $0x1]]
    %v1065 = vstv %s1064
    %v1066 = vmul.f32 %v746, %v1065
    %v1067 = vmul.f32 %v747, %v1065
    %s1068 = sld [smem:[#allocation17 + $0x2]]
    %v1069 = vstv %s1068
    %v1070 = vmul.f32 %v798, %v1069
    %v1071 = vmul.f32 %v799, %v1069
    %s1072 = sld [smem:[#allocation17 + $0x3]]
    %v1073 = vstv %s1072
    %v1074 = vmul.f32 %v850, %v1073
    %v1075 = vmul.f32 %v851, %v1073
    %s1076 = sld [smem:[#allocation17 + $0x4]]
    %v1077 = vstv %s1076
    %v1078 = vmul.f32 %v902, %v1077
    %v1079 = vmul.f32 %v903, %v1077
    %s1080 = sld [smem:[#allocation17 + $0x5]]
    %v1081 = vstv %s1080
    %v1082 = vmul.f32 %v954, %v1081
    %v1083 = vmul.f32 %v955, %v1081
    %s1084 = sld [smem:[#allocation17 + $0x6]]
    %v1085 = vstv %s1084
    %v1086 = vmul.f32 %v1006, %v1085
    %v1087 = vmul.f32 %v1007, %v1085
    %s1088 = sld [smem:[#allocation17 + $0x7]]
    %v1089 = vstv %s1088
    %v1090 = vmul.f32 %v1058, %v1089
    %v1091 = vmul.f32 %v1059, %v1089
    %v1092 = vadd.f32 %v1062, %v1066
    %v1093 = vadd.f32 %v1063, %v1067
    %v1094 = vadd.f32 %v1070, %v1074
    %v1095 = vadd.f32 %v1071, %v1075
    %v1096 = vadd.f32 %v1078, %v1082
    %v1097 = vadd.f32 %v1079, %v1083
    %v1098 = vadd.f32 %v1086, %v1090
    %v1099 = vadd.f32 %v1087, %v1091
    %v1100 = vadd.f32 %v1092, %v1094
    %v1101 = vadd.f32 %v1093, %v1095
    %v1102 = vadd.f32 %v1096, %v1098
    %v1103 = vadd.f32 %v1097, %v1099
    %v1104 = vadd.f32 %v1100, %v1102
    %v1105 = vadd.f32 %v1101, %v1103
    %s1106 = sld [smem:[#allocation18]]
    %v1107 = vstv %s1106
    %v1108 = vadd.f32 %v1104, %v1107
    %v1109 = vadd.f32 %v1105, %v1107
    %v1110 = vtanh.pop %v1108
    %v1111 = vtanh.pop %v1109
    %s1112 = sld [smem:[#allocation17 + $0x80]]
    %v1113 = vstv %s1112
    %v1114 = vmul.f32 %v694, %v1113
    %v1115 = vmul.f32 %v695, %v1113
    %s1116 = sld [smem:[#allocation17 + $0x81]]
    %v1117 = vstv %s1116
    %v1118 = vmul.f32 %v746, %v1117
    %v1119 = vmul.f32 %v747, %v1117
    %s1120 = sld [smem:[#allocation17 + $0x82]]
    %v1121 = vstv %s1120
    %v1122 = vmul.f32 %v798, %v1121
    %v1123 = vmul.f32 %v799, %v1121
    %s1124 = sld [smem:[#allocation17 + $0x83]]
    %v1125 = vstv %s1124
    %v1126 = vmul.f32 %v850, %v1125
    %v1127 = vmul.f32 %v851, %v1125
    %s1128 = sld [smem:[#allocation17 + $0x84]]
    %v1129 = vstv %s1128
    %v1130 = vmul.f32 %v902, %v1129
    %v1131 = vmul.f32 %v903, %v1129
    %s1132 = sld [smem:[#allocation17 + $0x85]]
    %v1133 = vstv %s1132
    %v1134 = vmul.f32 %v954, %v1133
    %v1135 = vmul.f32 %v955, %v1133
    %s1136 = sld [smem:[#allocation17 + $0x86]]
    %v1137 = vstv %s1136
    %v1138 = vmul.f32 %v1006, %v1137
    %v1139 = vmul.f32 %v1007, %v1137
    %s1140 = sld [smem:[#allocation17 + $0x87]]
    %v1141 = vstv %s1140
    %v1142 = vmul.f32 %v1058, %v1141
    %v1143 = vmul.f32 %v1059, %v1141
    %v1144 = vadd.f32 %v1114, %v1118
    %v1145 = vadd.f32 %v1115, %v1119
    %v1146 = vadd.f32 %v1122, %v1126
    %v1147 = vadd.f32 %v1123, %v1127
    %v1148 = vadd.f32 %v1130, %v1134
    %v1149 = vadd.f32 %v1131, %v1135
    %v1150 = vadd.f32 %v1138, %v1142
    %v1151 = vadd.f32 %v1139, %v1143
    %v1152 = vadd.f32 %v1144, %v1146
    %v1153 = vadd.f32 %v1145, %v1147
    %v1154 = vadd.f32 %v1148, %v1150
    %v1155 = vadd.f32 %v1149, %v1151
    %v1156 = vadd.f32 %v1152, %v1154
    %v1157 = vadd.f32 %v1153, %v1155
    %s1158 = sld [smem:[#allocation18 + $0x1]]
    %v1159 = vstv %s1158
    %v1160 = vadd.f32 %v1156, %v1159
    %v1161 = vadd.f32 %v1157, %v1159
    %v1162 = vtanh.pop %v1160
    %v1163 = vtanh.pop %v1161
    %s1164 = sld [smem:[#allocation17 + $0x100]]
    %v1165 = vstv %s1164
    %v1166 = vmul.f32 %v694, %v1165
    %v1167 = vmul.f32 %v695, %v1165
    %s1168 = sld [smem:[#allocation17 + $0x101]]
    %v1169 = vstv %s1168
    %v1170 = vmul.f32 %v746, %v1169
    %v1171 = vmul.f32 %v747, %v1169
    %s1172 = sld [smem:[#allocation17 + $0x102]]
    %v1173 = vstv %s1172
    %v1174 = vmul.f32 %v798, %v1173
    %v1175 = vmul.f32 %v799, %v1173
    %s1176 = sld [smem:[#allocation17 + $0x103]]
    %v1177 = vstv %s1176
    %v1178 = vmul.f32 %v850, %v1177
    %v1179 = vmul.f32 %v851, %v1177
    %s1180 = sld [smem:[#allocation17 + $0x104]]
    %v1181 = vstv %s1180
    %v1182 = vmul.f32 %v902, %v1181
    %v1183 = vmul.f32 %v903, %v1181
    %s1184 = sld [smem:[#allocation17 + $0x105]]
    %v1185 = vstv %s1184
    %v1186 = vmul.f32 %v954, %v1185
    %v1187 = vmul.f32 %v955, %v1185
    %s1188 = sld [smem:[#allocation17 + $0x106]]
    %v1189 = vstv %s1188
    %v1190 = vmul.f32 %v1006, %v1189
    %v1191 = vmul.f32 %v1007, %v1189
    %s1192 = sld [smem:[#allocation17 + $0x107]]
    %v1193 = vstv %s1192
    %v1194 = vmul.f32 %v1058, %v1193
    %v1195 = vmul.f32 %v1059, %v1193
    %v1196 = vadd.f32 %v1166, %v1170
    %v1197 = vadd.f32 %v1167, %v1171
    %v1198 = vadd.f32 %v1174, %v1178
    %v1199 = vadd.f32 %v1175, %v1179
    %v1200 = vadd.f32 %v1182, %v1186
    %v1201 = vadd.f32 %v1183, %v1187
    %v1202 = vadd.f32 %v1190, %v1194
    %v1203 = vadd.f32 %v1191, %v1195
    %v1204 = vadd.f32 %v1196, %v1198
    %v1205 = vadd.f32 %v1197, %v1199
    %v1206 = vadd.f32 %v1200, %v1202
    %v1207 = vadd.f32 %v1201, %v1203
    %v1208 = vadd.f32 %v1204, %v1206
    %v1209 = vadd.f32 %v1205, %v1207
    %s1210 = sld [smem:[#allocation18 + $0x2]]
    %v1211 = vstv %s1210
    %v1212 = vadd.f32 %v1208, %v1211
    %v1213 = vadd.f32 %v1209, %v1211
    %v1214 = vtanh.pop %v1212
    %v1215 = vtanh.pop %v1213
    %s1216 = sld [smem:[#allocation17 + $0x180]]
    %v1217 = vstv %s1216
    %v1218 = vmul.f32 %v694, %v1217
    %v1219 = vmul.f32 %v695, %v1217
    %s1220 = sld [smem:[#allocation17 + $0x181]]
    %v1221 = vstv %s1220
    %v1222 = vmul.f32 %v746, %v1221
    %v1223 = vmul.f32 %v747, %v1221
    %s1224 = sld [smem:[#allocation17 + $0x182]]
    %v1225 = vstv %s1224
    %v1226 = vmul.f32 %v798, %v1225
    %v1227 = vmul.f32 %v799, %v1225
    %s1228 = sld [smem:[#allocation17 + $0x183]]
    %v1229 = vstv %s1228
    %v1230 = vmul.f32 %v850, %v1229
    %v1231 = vmul.f32 %v851, %v1229
    %s1232 = sld [smem:[#allocation17 + $0x184]]
    %v1233 = vstv %s1232
    %v1234 = vmul.f32 %v902, %v1233
    %v1235 = vmul.f32 %v903, %v1233
    %s1236 = sld [smem:[#allocation17 + $0x185]]
    %v1237 = vstv %s1236
    %v1238 = vmul.f32 %v954, %v1237
    %v1239 = vmul.f32 %v955, %v1237
    %s1240 = sld [smem:[#allocation17 + $0x186]]
    %v1241 = vstv %s1240
    %v1242 = vmul.f32 %v1006, %v1241
    %v1243 = vmul.f32 %v1007, %v1241
    %s1244 = sld [smem:[#allocation17 + $0x187]]
    %v1245 = vstv %s1244
    %v1246 = vmul.f32 %v1058, %v1245
    %v1247 = vmul.f32 %v1059, %v1245
    %v1248 = vadd.f32 %v1218, %v1222
    %v1249 = vadd.f32 %v1219, %v1223
    %v1250 = vadd.f32 %v1226, %v1230
    %v1251 = vadd.f32 %v1227, %v1231
    %v1252 = vadd.f32 %v1234, %v1238
    %v1253 = vadd.f32 %v1235, %v1239
    %v1254 = vadd.f32 %v1242, %v1246
    %v1255 = vadd.f32 %v1243, %v1247
    %v1256 = vadd.f32 %v1248, %v1250
    %v1257 = vadd.f32 %v1249, %v1251
    %v1258 = vadd.f32 %v1252, %v1254
    %v1259 = vadd.f32 %v1253, %v1255
    %v1260 = vadd.f32 %v1256, %v1258
    %v1261 = vadd.f32 %v1257, %v1259
    %s1262 = sld [smem:[#allocation18 + $0x3]]
    %v1263 = vstv %s1262
    %v1264 = vadd.f32 %v1260, %v1263
    %v1265 = vadd.f32 %v1261, %v1263
    %v1266 = vtanh.pop %v1264
    %v1267 = vtanh.pop %v1265
    %s1268 = sld [smem:[#allocation17 + $0x200]]
    %v1269 = vstv %s1268
    %v1270 = vmul.f32 %v694, %v1269
    %v1271 = vmul.f32 %v695, %v1269
    %s1272 = sld [smem:[#allocation17 + $0x201]]
    %v1273 = vstv %s1272
    %v1274 = vmul.f32 %v746, %v1273
    %v1275 = vmul.f32 %v747, %v1273
    %s1276 = sld [smem:[#allocation17 + $0x202]]
    %v1277 = vstv %s1276
    %v1278 = vmul.f32 %v798, %v1277
    %v1279 = vmul.f32 %v799, %v1277
    %s1280 = sld [smem:[#allocation17 + $0x203]]
    %v1281 = vstv %s1280
    %v1282 = vmul.f32 %v850, %v1281
    %v1283 = vmul.f32 %v851, %v1281
    %s1284 = sld [smem:[#allocation17 + $0x204]]
    %v1285 = vstv %s1284
    %v1286 = vmul.f32 %v902, %v1285
    %v1287 = vmul.f32 %v903, %v1285
    %s1288 = sld [smem:[#allocation17 + $0x205]]
    %v1289 = vstv %s1288
    %v1290 = vmul.f32 %v954, %v1289
    %v1291 = vmul.f32 %v955, %v1289
    %s1292 = sld [smem:[#allocation17 + $0x206]]
    %v1293 = vstv %s1292
    %v1294 = vmul.f32 %v1006, %v1293
    %v1295 = vmul.f32 %v1007, %v1293
    %s1296 = sld [smem:[#allocation17 + $0x207]]
    %v1297 = vstv %s1296
    %v1298 = vmul.f32 %v1058, %v1297
    %v1299 = vmul.f32 %v1059, %v1297
    %v1300 = vadd.f32 %v1270, %v1274
    %v1301 = vadd.f32 %v1271, %v1275
    %v1302 = vadd.f32 %v1278, %v1282
    %v1303 = vadd.f32 %v1279, %v1283
    %v1304 = vadd.f32 %v1286, %v1290
    %v1305 = vadd.f32 %v1287, %v1291
    %v1306 = vadd.f32 %v1294, %v1298
    %v1307 = vadd.f32 %v1295, %v1299
    %v1308 = vadd.f32 %v1300, %v1302
    %v1309 = vadd.f32 %v1301, %v1303
    %v1310 = vadd.f32 %v1304, %v1306
    %v1311 = vadd.f32 %v1305, %v1307
    %v1312 = vadd.f32 %v1308, %v1310
    %v1313 = vadd.f32 %v1309, %v1311
    %s1314 = sld [smem:[#allocation18 + $0x4]]
    %v1315 = vstv %s1314
    %v1316 = vadd.f32 %v1312, %v1315
    %v1317 = vadd.f32 %v1313, %v1315
    %v1318 = vtanh.pop %v1316
    %v1319 = vtanh.pop %v1317
    %s1320 = sld [smem:[#allocation17 + $0x280]]
    %v1321 = vstv %s1320
    %v1322 = vmul.f32 %v694, %v1321
    %v1323 = vmul.f32 %v695, %v1321
    %s1324 = sld [smem:[#allocation17 + $0x281]]
    %v1325 = vstv %s1324
    %v1326 = vmul.f32 %v746, %v1325
    %v1327 = vmul.f32 %v747, %v1325
    %s1328 = sld [smem:[#allocation17 + $0x282]]
    %v1329 = vstv %s1328
    %v1330 = vmul.f32 %v798, %v1329
    %v1331 = vmul.f32 %v799, %v1329
    %s1332 = sld [smem:[#allocation17 + $0x283]]
    %v1333 = vstv %s1332
    %v1334 = vmul.f32 %v850, %v1333
    %v1335 = vmul.f32 %v851, %v1333
    %s1336 = sld [smem:[#allocation17 + $0x284]]
    %v1337 = vstv %s1336
    %v1338 = vmul.f32 %v902, %v1337
    %v1339 = vmul.f32 %v903, %v1337
    %s1340 = sld [smem:[#allocation17 + $0x285]]
    %v1341 = vstv %s1340
    %v1342 = vmul.f32 %v954, %v1341
    %v1343 = vmul.f32 %v955, %v1341
    %s1344 = sld [smem:[#allocation17 + $0x286]]
    %v1345 = vstv %s1344
    %v1346 = vmul.f32 %v1006, %v1345
    %v1347 = vmul.f32 %v1007, %v1345
    %s1348 = sld [smem:[#allocation17 + $0x287]]
    %v1349 = vstv %s1348
    %v1350 = vmul.f32 %v1058, %v1349
    %v1351 = vmul.f32 %v1059, %v1349
    %v1352 = vadd.f32 %v1322, %v1326
    %v1353 = vadd.f32 %v1323, %v1327
    %v1354 = vadd.f32 %v1330, %v1334
    %v1355 = vadd.f32 %v1331, %v1335
    %v1356 = vadd.f32 %v1338, %v1342
    %v1357 = vadd.f32 %v1339, %v1343
    %v1358 = vadd.f32 %v1346, %v1350
    %v1359 = vadd.f32 %v1347, %v1351
    %v1360 = vadd.f32 %v1352, %v1354
    %v1361 = vadd.f32 %v1353, %v1355
    %v1362 = vadd.f32 %v1356, %v1358
    %v1363 = vadd.f32 %v1357, %v1359
    %v1364 = vadd.f32 %v1360, %v1362
    %v1365 = vadd.f32 %v1361, %v1363
    %s1366 = sld [smem:[#allocation18 + $0x5]]
    %v1367 = vstv %s1366
    %v1368 = vadd.f32 %v1364, %v1367
    %v1369 = vadd.f32 %v1365, %v1367
    %v1370 = vtanh.pop %v1368
    %v1371 = vtanh.pop %v1369
    %s1372 = sld [smem:[#allocation17 + $0x300]]
    %v1373 = vstv %s1372
    %v1374 = vmul.f32 %v694, %v1373
    %v1375 = vmul.f32 %v695, %v1373
    %s1376 = sld [smem:[#allocation17 + $0x301]]
    %v1377 = vstv %s1376
    %v1378 = vmul.f32 %v746, %v1377
    %v1379 = vmul.f32 %v747, %v1377
    %s1380 = sld [smem:[#allocation17 + $0x302]]
    %v1381 = vstv %s1380
    %v1382 = vmul.f32 %v798, %v1381
    %v1383 = vmul.f32 %v799, %v1381
    %s1384 = sld [smem:[#allocation17 + $0x303]]
    %v1385 = vstv %s1384
    %v1386 = vmul.f32 %v850, %v1385
    %v1387 = vmul.f32 %v851, %v1385
    %s1388 = sld [smem:[#allocation17 + $0x304]]
    %v1389 = vstv %s1388
    %v1390 = vmul.f32 %v902, %v1389
    %v1391 = vmul.f32 %v903, %v1389
    %s1392 = sld [smem:[#allocation17 + $0x305]]
    %v1393 = vstv %s1392
    %v1394 = vmul.f32 %v954, %v1393
    %v1395 = vmul.f32 %v955, %v1393
    %s1396 = sld [smem:[#allocation17 + $0x306]]
    %v1397 = vstv %s1396
    %v1398 = vmul.f32 %v1006, %v1397
    %v1399 = vmul.f32 %v1007, %v1397
    %s1400 = sld [smem:[#allocation17 + $0x307]]
    %v1401 = vstv %s1400
    %v1402 = vmul.f32 %v1058, %v1401
    %v1403 = vmul.f32 %v1059, %v1401
    %v1404 = vadd.f32 %v1374, %v1378
    %v1405 = vadd.f32 %v1375, %v1379
    %v1406 = vadd.f32 %v1382, %v1386
    %v1407 = vadd.f32 %v1383, %v1387
    %v1408 = vadd.f32 %v1390, %v1394
    %v1409 = vadd.f32 %v1391, %v1395
    %v1410 = vadd.f32 %v1398, %v1402
    %v1411 = vadd.f32 %v1399, %v1403
    %v1412 = vadd.f32 %v1404, %v1406
    %v1413 = vadd.f32 %v1405, %v1407
    %v1414 = vadd.f32 %v1408, %v1410
    %v1415 = vadd.f32 %v1409, %v1411
    %v1416 = vadd.f32 %v1412, %v1414
    %v1417 = vadd.f32 %v1413, %v1415
    %s1418 = sld [smem:[#allocation18 + $0x6]]
    %v1419 = vstv %s1418
    %v1420 = vadd.f32 %v1416, %v1419
    %v1421 = vadd.f32 %v1417, %v1419
    %v1422 = vtanh.pop %v1420
    %v1423 = vtanh.pop %v1421
    %s1424 = sld [smem:[#allocation17 + $0x380]]
    %v1425 = vstv %s1424
    %v1426 = vmul.f32 %v694, %v1425
    %v1427 = vmul.f32 %v695, %v1425
    %s1428 = sld [smem:[#allocation17 + $0x381]]
    %v1429 = vstv %s1428
    %v1430 = vmul.f32 %v746, %v1429
    %v1431 = vmul.f32 %v747, %v1429
    %s1432 = sld [smem:[#allocation17 + $0x382]]
    %v1433 = vstv %s1432
    %v1434 = vmul.f32 %v798, %v1433
    %v1435 = vmul.f32 %v799, %v1433
    %s1436 = sld [smem:[#allocation17 + $0x383]]
    %v1437 = vstv %s1436
    %v1438 = vmul.f32 %v850, %v1437
    %v1439 = vmul.f32 %v851, %v1437
    %s1440 = sld [smem:[#allocation17 + $0x384]]
    %v1441 = vstv %s1440
    %v1442 = vmul.f32 %v902, %v1441
    %v1443 = vmul.f32 %v903, %v1441
    %s1444 = sld [smem:[#allocation17 + $0x385]]
    %v1445 = vstv %s1444
    %v1446 = vmul.f32 %v954, %v1445
    %v1447 = vmul.f32 %v955, %v1445
    %s1448 = sld [smem:[#allocation17 + $0x386]]
    %v1449 = vstv %s1448
    %v1450 = vmul.f32 %v1006, %v1449
    %v1451 = vmul.f32 %v1007, %v1449
    %s1452 = sld [smem:[#allocation17 + $0x387]]
    %v1453 = vstv %s1452
    %v1454 = vmul.f32 %v1058, %v1453
    %v1455 = vmul.f32 %v1059, %v1453
    %v1456 = vadd.f32 %v1426, %v1430
    %v1457 = vadd.f32 %v1427, %v1431
    %v1458 = vadd.f32 %v1434, %v1438
    %v1459 = vadd.f32 %v1435, %v1439
    %v1460 = vadd.f32 %v1442, %v1446
    %v1461 = vadd.f32 %v1443, %v1447
    %v1462 = vadd.f32 %v1450, %v1454
    %v1463 = vadd.f32 %v1451, %v1455
    %v1464 = vadd.f32 %v1456, %v1458
    %v1465 = vadd.f32 %v1457, %v1459
    %v1466 = vadd.f32 %v1460, %v1462
    %v1467 = vadd.f32 %v1461, %v1463
    %v1468 = vadd.f32 %v1464, %v1466
    %v1469 = vadd.f32 %v1465, %v1467
    %s1470 = sld [smem:[#allocation18 + $0x7]]
    %v1471 = vstv %s1470
    %v1472 = vadd.f32 %v1468, %v1471
    %v1473 = vadd.f32 %v1469, %v1471
    %v1474 = vtanh.pop %v1472
    %v1475 = vtanh.pop %v1473
    %s1476 = sld [smem:[#allocation20]]
    %v1477 = vstv %s1476
    %v1478 = vmul.f32 %v1110, %v1477
    %v1479 = vmul.f32 %v1111, %v1477
    %s1480 = sld [smem:[#allocation20 + $0x1]]
    %v1481 = vstv %s1480
    %v1482 = vmul.f32 %v1162, %v1481
    %v1483 = vmul.f32 %v1163, %v1481
    %s1484 = sld [smem:[#allocation20 + $0x2]]
    %v1485 = vstv %s1484
    %v1486 = vmul.f32 %v1214, %v1485
    %v1487 = vmul.f32 %v1215, %v1485
    %s1488 = sld [smem:[#allocation20 + $0x3]]
    %v1489 = vstv %s1488
    %v1490 = vmul.f32 %v1266, %v1489
    %v1491 = vmul.f32 %v1267, %v1489
    %s1492 = sld [smem:[#allocation20 + $0x4]]
    %v1493 = vstv %s1492
    %v1494 = vmul.f32 %v1318, %v1493
    %v1495 = vmul.f32 %v1319, %v1493
    %s1496 = sld [smem:[#allocation20 + $0x5]]
    %v1497 = vstv %s1496
    %v1498 = vmul.f32 %v1370, %v1497
    %v1499 = vmul.f32 %v1371, %v1497
    %s1500 = sld [smem:[#allocation20 + $0x6]]
    %v1501 = vstv %s1500
    %v1502 = vmul.f32 %v1422, %v1501
    %v1503 = vmul.f32 %v1423, %v1501
    %s1504 = sld [smem:[#allocation20 + $0x7]]
    %v1505 = vstv %s1504
    %v1506 = vmul.f32 %v1474, %v1505
    %v1507 = vmul.f32 %v1475, %v1505
    %v1508 = vadd.f32 %v1478, %v1482
    %v1509 = vadd.f32 %v1479, %v1483
    %v1510 = vadd.f32 %v1486, %v1490
    %v1511 = vadd.f32 %v1487, %v1491
    %v1512 = vadd.f32 %v1494, %v1498
    %v1513 = vadd.f32 %v1495, %v1499
    %v1514 = vadd.f32 %v1502, %v1506
    %v1515 = vadd.f32 %v1503, %v1507
    %v1516 = vadd.f32 %v1508, %v1510
    %v1517 = vadd.f32 %v1509, %v1511
    %v1518 = vadd.f32 %v1512, %v1514
    %v1519 = vadd.f32 %v1513, %v1515
    %v1520 = vadd.f32 %v1516, %v1518
    %v1521 = vadd.f32 %v1517, %v1519
    %s1522 = sld [smem:[#allocation2]]
    %v1523 = vstv %s1522
    %v1524 = vadd.f32 %v1520, %v1523
    %v1525 = vadd.f32 %v1521, %v1523
    %1526 = vst [vmem:[#allocation21] sm:$0xff] %v1524
    %1527 = vst [vmem:[#allocation21 + $0x8] sm:$0xff] %v1525
    // Predicated region
    $region86: #{tpu_custom_call.1} parent=1 // pred_check
      _
    $region87: #{tpu_custom_call.1} parent=1 // pred_check_branch
      %1529 = sbr.rel (0) target = $region89
    $region88: #{tpu_custom_call.1} parent=1 // pred_region
      %1531 = vsyncadd [#allocation5], 0
      %s1532 = sshll.u32 [#allocation21], 4
      %s1533 = int_to_ptr.vmem [resolvable:$true] %s1532
      %s1534 = sshll.u32 %s11, 4
      %s1535 = int_to_ptr.hbm [resolvable:$true] %s1534
      %1540 = dma.vmem_to_hbm [thread:$0]  %s1533, 256, %s1535, [#allocation5], 128, 128, 8
    $region89: #{tpu_custom_call.1} parent=1 // pred_fallthru
      _
    // Predicated region
    $region90: #{tpu_custom_call.1} parent=1 // pred_check
      _
    $region91: #{tpu_custom_call.1} parent=1 // pred_check_branch
      %1542 = sbr.rel (0) target = $region93
    $region92: #{tpu_custom_call.1} parent=1 // pred_region
      %1544 = dma.done [#allocation5], 256
    $region93: #{tpu_custom_call.1} parent=1 // pred_fallthru
      _
    %1545 = vsyncpa [#allocation4], 1
    %1546 = vsyncpa [#allocation5], 1
    %1547 = vsyncpa [#allocation6], 1
    %1548 = vsyncpa [#allocation10], 1
    %1549 = vsyncpa [#allocation13], 1
    %1550 = vsyncpa [#allocation16], 1
    %1551 = vsyncpa [#allocation7], 1
    %1552 = vsyncpa [#allocation19], 1

</llo_original>
